<compile_context>
chip_gen: v5e
topology: v5e:2x2
jax: 0.10.0
libtpu: 0.0.40
codegen_flags: <defaults>
</compile_context>

<pallas_src>
import math

import jax
import jax.numpy as jnp
from jax.experimental import pallas as pl
from jax.experimental.pallas import tpu as pltpu

HIDDEN = (256, 512, 512, 512, 256)      # MLP hidden widths (last Linear is bias-free)


def _round_up(x, m):
    return ((x + m - 1) // m) * m


# ---------------------------------------------------------------------------
# Kernel: feat_aug='dist' + 6-layer MLP (ReLU, last layer bias-free).
# bf16 weights / activations, f32 accumulation.  One row tile per grid step;
# all weights/biases use constant index_maps and stay VMEM-resident across tiles.
# ---------------------------------------------------------------------------
def _histidine_kernel(pos_ref, tgt_ref, sel_ref, w1_ref, b_ref,
                      w2_ref, w3_ref, w4_ref, w5_ref, w6_ref, o_ref):
    pos = pos_ref[...]                                   # (tm, 3P) f32
    diff = pos - tgt_ref[...]                            # (tm, 3P) f32
    sq = (diff * diff).astype(jnp.bfloat16)              # square in f32, round once

    # Per-particle distance via a 0/1 selection matmul (bf16 operands, f32 accum).
    dist = jnp.sqrt(jnp.dot(sq, sel_ref[...],
                            preferred_element_type=jnp.float32))       # (tm, P)

    # Feature augmentation: x = [pos | dist]  (disjoint lanes, in-VMEM concat),
    # matching the offline-packed W1 of shape (4P, 256).
    h = jnp.concatenate([pos, dist], axis=-1).astype(jnp.bfloat16)      # (tm, 4P)

    off = 0
    for w_ref, width in zip((w1_ref, w2_ref, w3_ref, w4_ref, w5_ref), HIDDEN):
        h = jnp.dot(h, w_ref[...], preferred_element_type=jnp.float32)
        h = jnp.maximum(h + b_ref[:, off:off + width], 0.0).astype(jnp.bfloat16)
        off += width

    # Last layer: bias-free; output is lane-padded to 128 (zeros beyond the real
    # 3P columns) so the store is lane-dense; sliced in the wrapper.
    o_ref[...] = jnp.dot(h, w6_ref[...], preferred_element_type=jnp.float32)


# ---------------------------------------------------------------------------
# Parameter init (PyTorch-Linear-style, uniform +-1/sqrt(fan_in)).  Weights are
# stored (in_dim, out_dim) so x @ W + b == PyTorch's x @ W.T + b.
# ---------------------------------------------------------------------------
def init_params(key, input_dim, output_dim):
    dims = (input_dim,) + HIDDEN + (output_dim,)
    params = []
    for i in range(6):
        key, kw, kb = jax.random.split(key, 3)
        bound = 1.0 / math.sqrt(dims[i])
        w = jax.random.uniform(kw, (dims[i], dims[i + 1]),
                               minval=-bound, maxval=bound, dtype=jnp.float32)
        params.append(w)
        if i < 5:                       # last Linear has bias=False
            b = jax.random.uniform(kb, (1, dims[i + 1]),
                                   minval=-bound, maxval=bound, dtype=jnp.float32)
            params.append(b)
    return params


def prepare_params(params, num_particles):
    """One-time packing: bf16 cast, W1 permute+merge, bias concat, dist selector."""
    w1, b1, w2, b2, w3, b3, w4, b4, w5, b5, w6 = params
    P = num_particles
    out_dim = w6.shape[1]
    out_pad = _round_up(out_dim, 128)

    # W1 rows are in interleaved feature order (x0,y0,z0,d0, x1,y1,z1,d1, ...).
    # Repack to [xyz rows (3P) | dist rows (P)] to match the kernel's [pos|dist] concat.
    w1r = w1.reshape(P, 4, w1.shape[1])
    w1_packed = jnp.concatenate(
        [w1r[:, :3, :].reshape(3 * P, -1), w1r[:, 3, :]], axis=0
    ).astype(jnp.bfloat16)                                   # (4P, 256)

    # 0/1 selector summing the 3 squared coords of each particle (bf16, exact 0/1).
    rows = jnp.arange(3 * P)
    cols = jnp.repeat(jnp.arange(P), 3)
    sel = jnp.zeros((3 * P, P), jnp.bfloat16).at[rows, cols].set(1.0)

    # All five biases packed into one lane-aligned (1, 2048) f32 operand.
    b_all = jnp.concatenate([b1, b2, b3, b4, b5], axis=1)    # offsets 0,256,768,1280,1792

    # Final layer padded to a lane-dense output width.
    w6p = jnp.zeros((w6.shape[0], out_pad), jnp.bfloat16
                    ).at[:, :out_dim].set(w6.astype(jnp.bfloat16))

    return (sel, w1_packed, b_all,
            w2.astype(jnp.bfloat16), w3.astype(jnp.bfloat16),
            w4.astype(jnp.bfloat16), w5.astype(jnp.bfloat16), w6p)


# ---------------------------------------------------------------------------
# Wrapper: force=True, feat_aug='dist'.
# ---------------------------------------------------------------------------
def histidine_forward(pos, target, prepared, *, tile_rows=512):
    B, P, _ = pos.shape
    rows = B
    in_dim = 3 * P
    out_pad = prepared[-1].shape[1]            # lane-padded output width (>= 3P)

    # Row tile: aim for a grid of at least 2 (keeps both v7x TensorCores busy and
    # bounds tail-padding waste), cap at tile_rows, always a multiple of 8.
    tm = min(tile_rows, max(8, _round_up(pl.cdiv(rows, 2), 8)))
    padded_rows = _round_up(rows, tm)

    pos_flat = pos.reshape(rows, in_dim)
    tgt_flat = target.reshape(rows, in_dim)
    if padded_rows != rows:                    # cheap row-only pad (no lane padding)
        pos_flat = jnp.pad(pos_flat, ((0, padded_rows - rows), (0, 0)))
        tgt_flat = jnp.pad(tgt_flat, ((0, padded_rows - rows), (0, 0)))

    row_spec = pl.BlockSpec((tm, in_dim), lambda i: (i, 0))

    def const_spec(a):                         # weight stays VMEM-resident across tiles
        return pl.BlockSpec(a.shape, lambda i: (0, 0))

    out = pl.pallas_call(
        _histidine_kernel,
        out_shape=jax.ShapeDtypeStruct((padded_rows, out_pad), jnp.float32),
        grid=(padded_rows // tm,),
        in_specs=[row_spec, row_spec] + [const_spec(a) for a in prepared],
        out_specs=pl.BlockSpec((tm, out_pad), lambda i: (i, 0)),
        compiler_params=pltpu.CompilerParams(
            dimension_semantics=("parallel",),
            vmem_limit_bytes=32 * 1024 * 1024),
    )(pos_flat, tgt_flat, *prepared)

    # TODO(synk): downstream consumers could take the padded (rows, 128) slab directly
    # and fuse this slice away; kept here to return the module's (B, P, 3) shape.
    return out[:rows, :in_dim].reshape(pos.shape)


# ---------------------------------------------------------------------------
# Pure-JAX reference with matched math (bf16 weights/activations, f32 accum)
# and the original (un-permuted, un-packed) parameter layout.
# ---------------------------------------------------------------------------
def ref_forward(pos, target, params):
    w1, b1, w2, b2, w3, b3, w4, b4, w5, b5, w6 = params
    dist = jnp.linalg.norm(pos - target, axis=-1, keepdims=True)
    x = jnp.concatenate([pos, dist], axis=-1).reshape(pos.shape[0], -1)

    def dense(v, w, b):
        y = jnp.dot(v.astype(jnp.bfloat16), w.astype(jnp.bfloat16),
                    preferred_element_type=jnp.float32)
        return y if b is None else y + b

    h = jnp.maximum(dense(x, w1, b1), 0.0)
    h = jnp.maximum(dense(h, w2, b2), 0.0)
    h = jnp.maximum(dense(h, w3, b3), 0.0)
    h = jnp.maximum(dense(h, w4, b4), 0.0)
    h = jnp.maximum(dense(h, w5, b5), 0.0)
    return dense(h, w6, None).reshape(pos.shape)


if __name__ == "__main__":
    B, P = 8, 8                       # batch, num_particles
    input_dim = P * 4                 # feat_aug='dist'
    output_dim = P * 3                # force=True

    key = jax.random.PRNGKey(0)
    kp, kt, kw, k2 = jax.random.split(key, 4)
    pos = jax.random.normal(kp, (B, P, 3), dtype=jnp.float32)
    target = jax.random.normal(kt, (B, P, 3), dtype=jnp.float32)

    params = init_params(kw, input_dim, output_dim)
    prepared = prepare_params(params, P)          # bf16 pack / permute done once

    fwd = jax.jit(histidine_forward)

    # Small (module-sized) batch.
    force = jax.block_until_ready(fwd(pos, target, prepared))
    assert force.shape == pos.shape and force.dtype == jnp.float32
    assert jnp.allclose(force, ref_forward(pos, target, params), atol=5e-3, rtol=5e-3)

    # Larger batch: 2 row tiles of 256 (both v7x TensorCores), weights VMEM-resident.
    B2 = 512
    kp2, kt2, kp3, kt3 = jax.random.split(k2, 4)
    pos2 = jax.random.normal(kp2, (B2, P, 3), dtype=jnp.float32)
    target2 = jax.random.normal(kt2, (B2, P, 3), dtype=jnp.float32)
    force2 = jax.block_until_ready(fwd(pos2, target2, prepared))
    assert force2.shape == pos2.shape
    assert jnp.allclose(force2, ref_forward(pos2, target2, params), atol=5e-3, rtol=5e-3)

    # Odd batch: exercises the cheap row-only tail-padding path (tm=24, grid=2).
    B3 = 40
    pos3 = jax.random.normal(kp3, (B3, P, 3), dtype=jnp.float32)
    target3 = jax.random.normal(kt3, (B3, P, 3), dtype=jnp.float32)
    force3 = jax.block_until_ready(fwd(pos3, target3, prepared))
    assert jnp.allclose(force3, ref_forward(pos3, target3, params), atol=5e-3, rtol=5e-3)

    print("KERNEL_OK")
</pallas_src>

<mosaic_0001>
module attributes {stable_mosaic.version = 11 : i64} {
  func.func @_histidine_kernel(%arg0: i32, %arg1: memref<8x24xf32, #tpu.memory_space<vmem>>, %arg2: memref<8x24xf32, #tpu.memory_space<vmem>>, %arg3: memref<24x8xbf16, #tpu.memory_space<vmem>>, %arg4: memref<32x256xbf16, #tpu.memory_space<vmem>>, %arg5: memref<1x2048xf32, #tpu.memory_space<vmem>>, %arg6: memref<256x512xbf16, #tpu.memory_space<vmem>>, %arg7: memref<512x512xbf16, #tpu.memory_space<vmem>>, %arg8: memref<512x512xbf16, #tpu.memory_space<vmem>>, %arg9: memref<512x256xbf16, #tpu.memory_space<vmem>>, %arg10: memref<256x128xbf16, #tpu.memory_space<vmem>>, %arg11: memref<8x128xf32, #tpu.memory_space<vmem>>) attributes {dimension_semantics = [#tpu.dimension_semantics<parallel>], iteration_bounds = array<i64: 1>, scalar_prefetch = 0 : i64, scratch_operands = 0 : i64, tpu.core_type = #tpu.core_type<tc>, window_params = [{transform_indices = @transform_0, window_bounds = array<i64: 8, 24>}, {transform_indices = @transform_1, window_bounds = array<i64: 8, 24>}, {pipeline_mode = #tpu.pipeline_mode<synchronous>, transform_indices = @transform_2, window_bounds = array<i64: 24, 8>}, {pipeline_mode = #tpu.pipeline_mode<synchronous>, transform_indices = @transform_3, window_bounds = array<i64: 32, 256>}, {pipeline_mode = #tpu.pipeline_mode<synchronous>, transform_indices = @transform_4, window_bounds = array<i64: 1, 2048>}, {pipeline_mode = #tpu.pipeline_mode<synchronous>, transform_indices = @transform_5, window_bounds = array<i64: 256, 512>}, {pipeline_mode = #tpu.pipeline_mode<synchronous>, transform_indices = @transform_6, window_bounds = array<i64: 512, 512>}, {pipeline_mode = #tpu.pipeline_mode<synchronous>, transform_indices = @transform_7, window_bounds = array<i64: 512, 512>}, {pipeline_mode = #tpu.pipeline_mode<synchronous>, transform_indices = @transform_8, window_bounds = array<i64: 512, 256>}, {pipeline_mode = #tpu.pipeline_mode<synchronous>, transform_indices = @transform_9, window_bounds = array<i64: 256, 128>}, {transform_indices = @transform_10, window_bounds = array<i64: 8, 128>}]} {
    %c0 = arith.constant 0 : index
    %c0_0 = arith.constant 0 : index
    %0 = vector.load %arg1[%c0, %c0_0] : memref<8x24xf32, #tpu.memory_space<vmem>>, vector<8x24xf32>
    %c0_1 = arith.constant 0 : index
    %c0_2 = arith.constant 0 : index
    %1 = vector.load %arg2[%c0_1, %c0_2] : memref<8x24xf32, #tpu.memory_space<vmem>>, vector<8x24xf32>
    %2 = arith.subf %0, %1 : vector<8x24xf32>
    %3 = arith.mulf %2, %2 : vector<8x24xf32>
    %4 = arith.truncf %3 : vector<8x24xf32> to vector<8x24xbf16>
    %c0_3 = arith.constant 0 : index
    %c0_4 = arith.constant 0 : index
    %5 = vector.load %arg3[%c0_3, %c0_4] : memref<24x8xbf16, #tpu.memory_space<vmem>>, vector<24x8xbf16>
    %cst = arith.constant dense<0.000000e+00> : vector<8x8xf32>
    %6 = tpu.matmul %4, %5, %cst {dimension_numbers = #tpu.dot_dimension_numbers<[1], [0], [0], [1], [0, 0, 1, 1], [], []>} : vector<8x24xbf16>, vector<24x8xbf16>, vector<8x8xf32> -> vector<8x8xf32>
    %7 = math.sqrt %6 : vector<8x8xf32>
    %8 = tpu.concatenate %0, %7 in 1 : vector<8x24xf32>, vector<8x8xf32> -> vector<8x32xf32>
    %9 = arith.truncf %8 : vector<8x32xf32> to vector<8x32xbf16>
    %c0_5 = arith.constant 0 : index
    %c0_6 = arith.constant 0 : index
    %10 = vector.load %arg4[%c0_5, %c0_6] : memref<32x256xbf16, #tpu.memory_space<vmem>>, vector<32x256xbf16>
    %cst_7 = arith.constant dense<0.000000e+00> : vector<8x256xf32>
    %11 = tpu.matmul %9, %10, %cst_7 {dimension_numbers = #tpu.dot_dimension_numbers<[1], [0], [0], [1], [0, 0, 1, 1], [], []>} : vector<8x32xbf16>, vector<32x256xbf16>, vector<8x256xf32> -> vector<8x256xf32>
    %c0_8 = arith.constant 0 : index
    %c0_9 = arith.constant 0 : index
    %12 = vector.load %arg5[%c0_8, %c0_9] : memref<1x2048xf32, #tpu.memory_space<vmem>>, vector<1x256xf32>
    %13 = vector.broadcast %12 : vector<1x256xf32> to vector<8x256xf32>
    %14 = arith.addf %11, %13 : vector<8x256xf32>
    %cst_10 = arith.constant 0.000000e+00 : f32
    %15 = vector.broadcast %cst_10 : f32 to vector<8x256xf32>
    %16 = arith.maximumf %14, %15 : vector<8x256xf32>
    %17 = arith.truncf %16 : vector<8x256xf32> to vector<8x256xbf16>
    %c0_11 = arith.constant 0 : index
    %c0_12 = arith.constant 0 : index
    %18 = vector.load %arg6[%c0_11, %c0_12] : memref<256x512xbf16, #tpu.memory_space<vmem>>, vector<256x512xbf16>
    %cst_13 = arith.constant dense<0.000000e+00> : vector<8x512xf32>
    %19 = tpu.matmul %17, %18, %cst_13 {dimension_numbers = #tpu.dot_dimension_numbers<[1], [0], [0], [1], [0, 0, 1, 1], [], []>} : vector<8x256xbf16>, vector<256x512xbf16>, vector<8x512xf32> -> vector<8x512xf32>
    %c0_14 = arith.constant 0 : index
    %c256 = arith.constant 256 : index
    %20 = vector.load %arg5[%c0_14, %c256] : memref<1x2048xf32, #tpu.memory_space<vmem>>, vector<1x512xf32>
    %21 = vector.broadcast %20 : vector<1x512xf32> to vector<8x512xf32>
    %22 = arith.addf %19, %21 : vector<8x512xf32>
    %cst_15 = arith.constant 0.000000e+00 : f32
    %23 = vector.broadcast %cst_15 : f32 to vector<8x512xf32>
    %24 = arith.maximumf %22, %23 : vector<8x512xf32>
    %25 = arith.truncf %24 : vector<8x512xf32> to vector<8x512xbf16>
    %c0_16 = arith.constant 0 : index
    %c0_17 = arith.constant 0 : index
    %26 = vector.load %arg7[%c0_16, %c0_17] : memref<512x512xbf16, #tpu.memory_space<vmem>>, vector<512x512xbf16>
    %cst_18 = arith.constant dense<0.000000e+00> : vector<8x512xf32>
    %27 = tpu.matmul %25, %26, %cst_18 {dimension_numbers = #tpu.dot_dimension_numbers<[1], [0], [0], [1], [0, 0, 1, 1], [], []>} : vector<8x512xbf16>, vector<512x512xbf16>, vector<8x512xf32> -> vector<8x512xf32>
    %c0_19 = arith.constant 0 : index
    %c768 = arith.constant 768 : index
    %28 = vector.load %arg5[%c0_19, %c768] : memref<1x2048xf32, #tpu.memory_space<vmem>>, vector<1x512xf32>
    %29 = vector.broadcast %28 : vector<1x512xf32> to vector<8x512xf32>
    %30 = arith.addf %27, %29 : vector<8x512xf32>
    %cst_20 = arith.constant 0.000000e+00 : f32
    %31 = vector.broadcast %cst_20 : f32 to vector<8x512xf32>
    %32 = arith.maximumf %30, %31 : vector<8x512xf32>
    %33 = arith.truncf %32 : vector<8x512xf32> to vector<8x512xbf16>
    %c0_21 = arith.constant 0 : index
    %c0_22 = arith.constant 0 : index
    %34 = vector.load %arg8[%c0_21, %c0_22] : memref<512x512xbf16, #tpu.memory_space<vmem>>, vector<512x512xbf16>
    %cst_23 = arith.constant dense<0.000000e+00> : vector<8x512xf32>
    %35 = tpu.matmul %33, %34, %cst_23 {dimension_numbers = #tpu.dot_dimension_numbers<[1], [0], [0], [1], [0, 0, 1, 1], [], []>} : vector<8x512xbf16>, vector<512x512xbf16>, vector<8x512xf32> -> vector<8x512xf32>
    %c0_24 = arith.constant 0 : index
    %c1280 = arith.constant 1280 : index
    %36 = vector.load %arg5[%c0_24, %c1280] : memref<1x2048xf32, #tpu.memory_space<vmem>>, vector<1x512xf32>
    %37 = vector.broadcast %36 : vector<1x512xf32> to vector<8x512xf32>
    %38 = arith.addf %35, %37 : vector<8x512xf32>
    %cst_25 = arith.constant 0.000000e+00 : f32
    %39 = vector.broadcast %cst_25 : f32 to vector<8x512xf32>
    %40 = arith.maximumf %38, %39 : vector<8x512xf32>
    %41 = arith.truncf %40 : vector<8x512xf32> to vector<8x512xbf16>
    %c0_26 = arith.constant 0 : index
    %c0_27 = arith.constant 0 : index
    %42 = vector.load %arg9[%c0_26, %c0_27] : memref<512x256xbf16, #tpu.memory_space<vmem>>, vector<512x256xbf16>
    %cst_28 = arith.constant dense<0.000000e+00> : vector<8x256xf32>
    %43 = tpu.matmul %41, %42, %cst_28 {dimension_numbers = #tpu.dot_dimension_numbers<[1], [0], [0], [1], [0, 0, 1, 1], [], []>} : vector<8x512xbf16>, vector<512x256xbf16>, vector<8x256xf32> -> vector<8x256xf32>
    %c0_29 = arith.constant 0 : index
    %c1792 = arith.constant 1792 : index
    %44 = vector.load %arg5[%c0_29, %c1792] : memref<1x2048xf32, #tpu.memory_space<vmem>>, vector<1x256xf32>
    %45 = vector.broadcast %44 : vector<1x256xf32> to vector<8x256xf32>
    %46 = arith.addf %43, %45 : vector<8x256xf32>
    %cst_30 = arith.constant 0.000000e+00 : f32
    %47 = vector.broadcast %cst_30 : f32 to vector<8x256xf32>
    %48 = arith.maximumf %46, %47 : vector<8x256xf32>
    %49 = arith.truncf %48 : vector<8x256xf32> to vector<8x256xbf16>
    %c0_31 = arith.constant 0 : index
    %c0_32 = arith.constant 0 : index
    %50 = vector.load %arg10[%c0_31, %c0_32] : memref<256x128xbf16, #tpu.memory_space<vmem>>, vector<256x128xbf16>
    %cst_33 = arith.constant dense<0.000000e+00> : vector<8x128xf32>
    %51 = tpu.matmul %49, %50, %cst_33 {dimension_numbers = #tpu.dot_dimension_numbers<[1], [0], [0], [1], [0, 0, 1, 1], [], []>} : vector<8x256xbf16>, vector<256x128xbf16>, vector<8x128xf32> -> vector<8x128xf32>
    %c0_34 = arith.constant 0 : index
    %c0_35 = arith.constant 0 : index
    %52 = vector.load %arg11[%c0_34, %c0_35] : memref<8x128xf32, #tpu.memory_space<vmem>>, vector<8x128xf32>
    tpu.vector_store %arg11[%c0_34, %c0_35], %51 {strides = array<i32>} : memref<8x128xf32, #tpu.memory_space<vmem>>, vector<8x128xf32>,
    return
  }
  func.func @transform_0(%arg0: i32) -> (i32, i32) {
    %c0_i32 = arith.constant 0 : i32
    %c0_i32_0 = arith.constant 0 : i32
    return %arg0, %c0_i32 : i32, i32
  }
  func.func @transform_1(%arg0: i32) -> (i32, i32) {
    %c0_i32 = arith.constant 0 : i32
    %c0_i32_0 = arith.constant 0 : i32
    return %arg0, %c0_i32 : i32, i32
  }
  func.func @transform_2(%arg0: i32) -> (i32, i32) {
    %c0_i32 = arith.constant 0 : i32
    %c0_i32_0 = arith.constant 0 : i32
    %c0_i32_1 = arith.constant 0 : i32
    return %c0_i32, %c0_i32_0 : i32, i32
  }
  func.func @transform_3(%arg0: i32) -> (i32, i32) {
    %c0_i32 = arith.constant 0 : i32
    %c0_i32_0 = arith.constant 0 : i32
    %c0_i32_1 = arith.constant 0 : i32
    return %c0_i32, %c0_i32_0 : i32, i32
  }
  func.func @transform_4(%arg0: i32) -> (i32, i32) {
    %c0_i32 = arith.constant 0 : i32
    %c0_i32_0 = arith.constant 0 : i32
    %c0_i32_1 = arith.constant 0 : i32
    return %c0_i32, %c0_i32_0 : i32, i32
  }
  func.func @transform_5(%arg0: i32) -> (i32, i32) {
    %c0_i32 = arith.constant 0 : i32
    %c0_i32_0 = arith.constant 0 : i32
    %c0_i32_1 = arith.constant 0 : i32
    return %c0_i32, %c0_i32_0 : i32, i32
  }
  func.func @transform_6(%arg0: i32) -> (i32, i32) {
    %c0_i32 = arith.constant 0 : i32
    %c0_i32_0 = arith.constant 0 : i32
    %c0_i32_1 = arith.constant 0 : i32
    return %c0_i32, %c0_i32_0 : i32, i32
  }
  func.func @transform_7(%arg0: i32) -> (i32, i32) {
    %c0_i32 = arith.constant 0 : i32
    %c0_i32_0 = arith.constant 0 : i32
    %c0_i32_1 = arith.constant 0 : i32
    return %c0_i32, %c0_i32_0 : i32, i32
  }
  func.func @transform_8(%arg0: i32) -> (i32, i32) {
    %c0_i32 = arith.constant 0 : i32
    %c0_i32_0 = arith.constant 0 : i32
    %c0_i32_1 = arith.constant 0 : i32
    return %c0_i32, %c0_i32_0 : i32, i32
  }
  func.func @transform_9(%arg0: i32) -> (i32, i32) {
    %c0_i32 = arith.constant 0 : i32
    %c0_i32_0 = arith.constant 0 : i32
    %c0_i32_1 = arith.constant 0 : i32
    return %c0_i32, %c0_i32_0 : i32, i32
  }
  func.func @transform_10(%arg0: i32) -> (i32, i32) {
    %c0_i32 = arith.constant 0 : i32
    %c0_i32_0 = arith.constant 0 : i32
    return %arg0, %c0_i32 : i32, i32
  }
}

</mosaic_0001>

<llo_original>
// kernel: histidine_forward.1
$region0: #{histidine_forward.1}
  #allocation0 [shape = 'u32[]', space=smem, size = 0x4, offset = 0x4, fixed_abs, tag = 'smem constant byte address 0x4 - core index']
  #allocation1 [shape = 'u32[72,128]{1,0:T(1,128)}', space=vmem, size = 0x9000, scoped, tag = 'internal scratch']
  %s0 = inlined_call_operand.vmem [shape: f32[8,24], index: 0, kind: input, shape index: {}]
  %s1 = inlined_call_operand.vmem [shape: f32[8,24], index: 1, kind: input, shape index: {}]
  %s2 = inlined_call_operand.vmem [shape: bf16[24,8], index: 2, kind: input, shape index: {}]
  %s3 = inlined_call_operand.vmem [shape: bf16[32,256], index: 3, kind: input, shape index: {}]
  %s4 = inlined_call_operand.vmem [shape: f32[1,2048], index: 4, kind: input, shape index: {}]
  %s5 = inlined_call_operand.hbm [shape: bf16[256,512], index: 5, kind: input, shape index: {}]
  %s6 = inlined_call_operand.hbm [shape: bf16[512,512], index: 6, kind: input, shape index: {}]
  %s7 = inlined_call_operand.hbm [shape: bf16[512,512], index: 7, kind: input, shape index: {}]
  %s8 = inlined_call_operand.hbm [shape: bf16[512,256], index: 8, kind: input, shape index: {}]
  %s9 = inlined_call_operand.vmem [shape: bf16[256,128], index: 9, kind: input, shape index: {}]
  %s10 = inlined_call_operand.vmem [shape: f32[8,128], index: 10, kind: output, shape index: {}]
  %s11 = sld [smem:[#allocation0]]
  $region66: #{histidine_forward.1} parent=0
    _
  %s13 = ssub.s32 1, %s11
  %s14 = scalar_select 0, %s13, %s11
  $region1: #{histidine_forward.1} parent=0
    #allocation2 [shape = 'u8[262144]{0}', space=vmem, size = 0x40000, scoped, tag = 'input window, operand 5, single buffered']
    #allocation3 [shape = 's32[1]{0}', space=sflag, size = 0x4, scoped, tag = 'scoped memory for histidine_forward.1']
    #allocation4 [shape = 'u8[524288]{0}', space=vmem, size = 0x80000, scoped, tag = 'input window, operand 6, single buffered']
    #allocation5 [shape = 's32[1]{0}', space=sflag, size = 0x4, scoped, tag = 'scoped memory for histidine_forward.1']
    #allocation6 [shape = 'u8[524288]{0}', space=vmem, size = 0x80000, scoped, tag = 'input window, operand 7, single buffered']
    #allocation7 [shape = 'u8[262144]{0}', space=vmem, size = 0x40000, scoped, tag = 'input window, operand 8, single buffered']
    #allocation8 [shape = 's32[1]{0}', space=sflag, size = 0x4, scoped, tag = 'scoped memory for histidine_forward.1']
    %15 = vsyncpa [#allocation3], 0
    %16 = vsyncpa [#allocation5], 0
    %17 = vsyncpa [#allocation8], 0
    // Predicated region
    $region2: #{histidine_forward.1} parent=1 // pred_check
      _
    $region3: #{histidine_forward.1} parent=1 // pred_check_branch
      %19 = sbr.rel (0) target = $region5
    $region4: #{histidine_forward.1} parent=1 // pred_region
      _
    $region5: #{histidine_forward.1} parent=1 // pred_fallthru
      _
    // Predicated region
    $region6: #{histidine_forward.1} parent=1 // pred_check
      _
    $region7: #{histidine_forward.1} parent=1 // pred_check_branch
      %21 = sbr.rel (0) target = $region9
    $region8: #{histidine_forward.1} parent=1 // pred_region
      _
    $region9: #{histidine_forward.1} parent=1 // pred_fallthru
      _
    // Predicated region
    $region10: #{histidine_forward.1} parent=1 // pred_check
      _
    $region11: #{histidine_forward.1} parent=1 // pred_check_branch
      %23 = sbr.rel (0) target = $region13
    $region12: #{histidine_forward.1} parent=1 // pred_region
      _
    $region13: #{histidine_forward.1} parent=1 // pred_fallthru
      _
    // Predicated region
    $region14: #{histidine_forward.1} parent=1 // pred_check
      _
    $region15: #{histidine_forward.1} parent=1 // pred_check_branch
      %25 = sbr.rel (0) target = $region17
    $region16: #{histidine_forward.1} parent=1 // pred_region
      _
    $region17: #{histidine_forward.1} parent=1 // pred_fallthru
      _
    // Predicated region
    $region18: #{histidine_forward.1} parent=1 // pred_check
      _
    $region19: #{histidine_forward.1} parent=1 // pred_check_branch
      %27 = sbr.rel (0) target = $region21
    $region20: #{histidine_forward.1} parent=1 // pred_region
      _
    $region21: #{histidine_forward.1} parent=1 // pred_fallthru
      _
    // Predicated region
    $region22: #{histidine_forward.1} parent=1 // pred_check
      _
    $region23: #{histidine_forward.1} parent=1 // pred_check_branch
      %29 = sbr.rel (0) target = $region25
    $region24: #{histidine_forward.1} parent=1 // pred_region
      %31 = vsyncadd [#allocation3], 0
      %s32 = sshll.u32 %s5, 4
      %s33 = int_to_ptr.hbm [resolvable:$true] %s32
      %s34 = sshll.u32 [#allocation2], 4
      %s35 = int_to_ptr.vmem [resolvable:$true] %s34
      %40 = dma.hbm_to_vmem [thread:$0]  %s33, 8192, %s35, [#allocation3], 256, 256, 16
    $region25: #{histidine_forward.1} parent=1 // pred_fallthru
      _
    // Predicated region
    $region26: #{histidine_forward.1} parent=1 // pred_check
      _
    $region27: #{histidine_forward.1} parent=1 // pred_check_branch
      %42 = sbr.rel (0) target = $region29
    $region28: #{histidine_forward.1} parent=1 // pred_region
      %44 = vsyncadd [#allocation5], 0
      %s45 = sshll.u32 %s6, 4
      %s46 = int_to_ptr.hbm [resolvable:$true] %s45
      %s47 = sshll.u32 [#allocation4], 4
      %s48 = int_to_ptr.vmem [resolvable:$true] %s47
      %53 = dma.hbm_to_vmem [thread:$0]  %s46, 16384, %s48, [#allocation5], 256, 256, 16
    $region29: #{histidine_forward.1} parent=1 // pred_fallthru
      _
    // Predicated region
    $region30: #{histidine_forward.1} parent=1 // pred_check
      _
    $region31: #{histidine_forward.1} parent=1 // pred_check_branch
      %55 = sbr.rel (0) target = $region33
    $region32: #{histidine_forward.1} parent=1 // pred_region
      %57 = vsyncadd [#allocation5], 0
      %s58 = sshll.u32 %s7, 4
      %s59 = int_to_ptr.hbm [resolvable:$true] %s58
      %s60 = sshll.u32 [#allocation6], 4
      %s61 = int_to_ptr.vmem [resolvable:$true] %s60
      %66 = dma.hbm_to_vmem [thread:$0]  %s59, 16384, %s61, [#allocation5], 256, 256, 16
    $region33: #{histidine_forward.1} parent=1 // pred_fallthru
      _
    // Predicated region
    $region34: #{histidine_forward.1} parent=1 // pred_check
      _
    $region35: #{histidine_forward.1} parent=1 // pred_check_branch
      %68 = sbr.rel (0) target = $region37
    $region36: #{histidine_forward.1} parent=1 // pred_region
      %70 = vsyncadd [#allocation8], 0
      %s71 = sshll.u32 %s8, 4
      %s72 = int_to_ptr.hbm [resolvable:$true] %s71
      %s73 = sshll.u32 [#allocation7], 4
      %s74 = int_to_ptr.vmem [resolvable:$true] %s73
      %79 = dma.hbm_to_vmem [thread:$0]  %s72, 8192, %s74, [#allocation8], 128, 128, 8
    $region37: #{histidine_forward.1} parent=1 // pred_fallthru
      _
    // Predicated region
    $region38: #{histidine_forward.1} parent=1 // pred_check
      _
    $region39: #{histidine_forward.1} parent=1 // pred_check_branch
      %81 = sbr.rel (0) target = $region41
    $region40: #{histidine_forward.1} parent=1 // pred_region
      _
    $region41: #{histidine_forward.1} parent=1 // pred_fallthru
      _
    // Predicated region
    $region42: #{histidine_forward.1} parent=1 // pred_check
      _
    $region43: #{histidine_forward.1} parent=1 // pred_check_branch
      %83 = sbr.rel (0) target = $region45
    $region44: #{histidine_forward.1} parent=1 // pred_region
      %85 = dma.done [#allocation3], 8192
    $region45: #{histidine_forward.1} parent=1 // pred_fallthru
      _
    // Predicated region
    $region46: #{histidine_forward.1} parent=1 // pred_check
      _
    $region47: #{histidine_forward.1} parent=1 // pred_check_branch
      %87 = sbr.rel (0) target = $region49
    $region48: #{histidine_forward.1} parent=1 // pred_region
      %89 = dma.done [#allocation5], 16384
    $region49: #{histidine_forward.1} parent=1 // pred_fallthru
      _
    // Predicated region
    $region50: #{histidine_forward.1} parent=1 // pred_check
      _
    $region51: #{histidine_forward.1} parent=1 // pred_check_branch
      %91 = sbr.rel (0) target = $region53
    $region52: #{histidine_forward.1} parent=1 // pred_region
      %93 = dma.done [#allocation5], 16384
    $region53: #{histidine_forward.1} parent=1 // pred_fallthru
      _
    // Predicated region
    $region54: #{histidine_forward.1} parent=1 // pred_check
      _
    $region55: #{histidine_forward.1} parent=1 // pred_check_branch
      %95 = sbr.rel (0) target = $region57
    $region56: #{histidine_forward.1} parent=1 // pred_region
      %97 = dma.done [#allocation8], 8192
    $region57: #{histidine_forward.1} parent=1 // pred_fallthru
      _
    %v99 = vld [vmem:[%s0] sm:$0xff]
    %v100 = vld [vmem:[%s1] sm:$0xff]
    %v101 = vsub.f32 %v99, %v100
    %v102 = vmul.f32 %v101, %v101
    %v103 = vpack.c.bf16 %v102, %v102
    %v104 = vld [vmem:[%s2] sm:$0xf]
    %v105 = vld [vmem:[%s2 + $0x4] sm:$0xf]
    %v106 = vld [vmem:[%s2 + $0x8] sm:$0xf]
    %v110 = vunpack.c.l.b16 %v104
    %v111 = vunpack.c.l.b16 %v105
    %v112 = vunpack.c.l.b16 %v106
    %v113 = vpack.c.b16 %v111, %v110
    %v114 = vpack.c.b16 %v112, %v112
    %vm116 = vcmask 195584
    %v118 = vsel %vm116, %v103, 0
    %vm120 = vcmask 1043456
    %v122 = vsel %vm120, %v114, 0
    %124 = vmatpush.bf16.msra.mxu0 0
    %125 = vmatpush.bf16.msra.mxu0 0
    %126 = vmatpush.bf16.msra.mxu0 0
    %127 = vmatpush.bf16.msra.mxu0 0
    %128 = vmatpush.bf16.msra.mxu0 0
    %129 = vmatpush.bf16.msra.mxu0 0
    %130 = vmatpush.bf16.msra.mxu0 %v122
    %131 = vmatpush.bf16.msra.mxu0 %v113
    %132 = vmatmul.bf16.gmra.mxu0 %v118
    %v133 = vpop.f32.mrf.mxu0
    %v134 = vadd.f32 0.0, %v133
    %v135 = vpop.f32.mrf.mxu0
    %136 = vdwg.mxu0
    %v137 = vrsqrt.pop %v134
    %v138 = vmul.f32 %v137, %v134
    %v139 = vmul.f32 %v138, %v137
    %v140 = vmul.f32 0.5, %v139
    %v141 = vsub.f32 1.5, %v140
    %v142 = vmul.f32 %v137, %v141
    %v143 = vmul.f32 %v134, %v142
    %vm144 = vcmp.eq.f32.partialorder %v134, inf
    %v145 = vsel %vm144, %v134, %v143
    %vm146 = vcmp.eq.f32.partialorder %v134, 0.0
    %v147 = vand.u32 %v134, 2147483648
    %v148 = vsel %vm146, %v147, %v145
    %150 = vrot.lane.b32.xlu0 %v148, 24
    %v151 = vpop.permute.xlu0 %150
    %v153 = vsel %vm116, %v99, %v151
    %v154 = vpack.c.bf16 %v153, %v153
    %v155 = vld [vmem:[%s3] sm:$0xff]
    %v156 = vld [vmem:[%s3 + $0x8] sm:$0xff]
    %v157 = vld [vmem:[%s3 + $0x10] sm:$0xff]
    %v158 = vld [vmem:[%s3 + $0x18] sm:$0xff]
    %v159 = vld [vmem:[%s4] sm:$0x3]
    %v161 = vperm.slane %v159, 0
    %v162 = vperm.slane %v159, 1
    %v169 = vunpack.c.l.b16 %v155
    %v170 = vunpack.c.h.b16 %v155
    %v171 = vunpack.c.l.b16 %v156
    %v172 = vunpack.c.h.b16 %v156
    %v173 = vunpack.c.l.b16 %v157
    %v174 = vunpack.c.h.b16 %v157
    %v175 = vunpack.c.l.b16 %v158
    %v176 = vunpack.c.h.b16 %v158
    %v177 = vpack.c.b16 %v171, %v169
    %v178 = vpack.c.b16 %v172, %v170
    %v179 = vpack.c.b16 %v175, %v173
    %v180 = vpack.c.b16 %v176, %v174
    %vm185 = vcmask 261120
    %v187 = vsel %vm185, %v154, 0
    %189 = vmatpush.bf16.msra.mxu0 0
    %190 = vmatpush.bf16.msra.mxu0 0
    %191 = vmatpush.bf16.msra.mxu0 0
    %192 = vmatpush.bf16.msra.mxu0 0
    %193 = vmatpush.bf16.msra.mxu0 0
    %194 = vmatpush.bf16.msra.mxu0 0
    %195 = vmatpush.bf16.msra.mxu0 %v179
    %196 = vmatpush.bf16.msra.mxu0 %v177
    %197 = vmatmul.bf16.gmra.mxu0 %v187
    %v198 = vpop.f32.mrf.mxu0
    %v199 = vadd.f32 %v161, %v198
    %v200 = vpop.f32.mrf.mxu0
    %201 = vdwg.mxu0
    %202 = vmatpush.bf16.msra.mxu0 0
    %203 = vmatpush.bf16.msra.mxu0 0
    %204 = vmatpush.bf16.msra.mxu0 0
    %205 = vmatpush.bf16.msra.mxu0 0
    %206 = vmatpush.bf16.msra.mxu0 0
    %207 = vmatpush.bf16.msra.mxu0 0
    %208 = vmatpush.bf16.msra.mxu0 %v180
    %209 = vmatpush.bf16.msra.mxu0 %v178
    %210 = vmatmul.bf16.gmra.mxu0 %v187
    %v211 = vpop.f32.mrf.mxu0
    %v212 = vadd.f32 %v162, %v211
    %v213 = vpop.f32.mrf.mxu0
    %214 = vdwg.mxu0
    %v215 = vmax.f32 %v199, 0.0
    %v216 = vmax.f32 %v212, 0.0
    %v217 = vpack.c.bf16 %v215, %v215
    %v218 = vpack.c.bf16 %v216, %v216
    %v219 = vld [vmem:[#allocation2] sm:$0xff]
    %v220 = vld [vmem:[#allocation2 + $0x8] sm:$0xff]
    %v221 = vld [vmem:[#allocation2 + $0x10] sm:$0xff]
    %v222 = vld [vmem:[#allocation2 + $0x18] sm:$0xff]
    %v223 = vld [vmem:[#allocation2 + $0x20] sm:$0xff]
    %v224 = vld [vmem:[#allocation2 + $0x28] sm:$0xff]
    %v225 = vld [vmem:[#allocation2 + $0x30] sm:$0xff]
    %v226 = vld [vmem:[#allocation2 + $0x38] sm:$0xff]
    %v227 = vld [vmem:[#allocation2 + $0x40] sm:$0xff]
    %v228 = vld [vmem:[#allocation2 + $0x48] sm:$0xff]
    %v229 = vld [vmem:[#allocation2 + $0x50] sm:$0xff]
    %v230 = vld [vmem:[#allocation2 + $0x58] sm:$0xff]
    %v231 = vld [vmem:[#allocation2 + $0x60] sm:$0xff]
    %v232 = vld [vmem:[#allocation2 + $0x68] sm:$0xff]
    %v233 = vld [vmem:[#allocation2 + $0x70] sm:$0xff]
    %v234 = vld [vmem:[#allocation2 + $0x78] sm:$0xff]
    %v235 = vld [vmem:[#allocation2 + $0x80] sm:$0xff]
    %v236 = vld [vmem:[#allocation2 + $0x88] sm:$0xff]
    %v237 = vld [vmem:[#allocation2 + $0x90] sm:$0xff]
    %v238 = vld [vmem:[#allocation2 + $0x98] sm:$0xff]
    %v239 = vld [vmem:[#allocation2 + $0xa0] sm:$0xff]
    %v240 = vld [vmem:[#allocation2 + $0xa8] sm:$0xff]
    %v241 = vld [vmem:[#allocation2 + $0xb0] sm:$0xff]
    %v242 = vld [vmem:[#allocation2 + $0xb8] sm:$0xff]
    %v243 = vld [vmem:[#allocation2 + $0xc0] sm:$0xff]
    %v244 = vld [vmem:[#allocation2 + $0xc8] sm:$0xff]
    %v245 = vld [vmem:[#allocation2 + $0xd0] sm:$0xff]
    %v246 = vld [vmem:[#allocation2 + $0xd8] sm:$0xff]
    %v247 = vld [vmem:[#allocation2 + $0xe0] sm:$0xff]
    %v248 = vld [vmem:[#allocation2 + $0xe8] sm:$0xff]
    %v249 = vld [vmem:[#allocation2 + $0xf0] sm:$0xff]
    %v250 = vld [vmem:[#allocation2 + $0xf8] sm:$0xff]
    %v251 = vld [vmem:[#allocation2 + $0x100] sm:$0xff]
    %v252 = vld [vmem:[#allocation2 + $0x108] sm:$0xff]
    %v253 = vld [vmem:[#allocation2 + $0x110] sm:$0xff]
    %v254 = vld [vmem:[#allocation2 + $0x118] sm:$0xff]
    %v255 = vld [vmem:[#allocation2 + $0x120] sm:$0xff]
    %v256 = vld [vmem:[#allocation2 + $0x128] sm:$0xff]
    %v257 = vld [vmem:[#allocation2 + $0x130] sm:$0xff]
    %v258 = vld [vmem:[#allocation2 + $0x138] sm:$0xff]
    %v259 = vld [vmem:[#allocation2 + $0x140] sm:$0xff]
    %v260 = vld [vmem:[#allocation2 + $0x148] sm:$0xff]
    %v261 = vld [vmem:[#allocation2 + $0x150] sm:$0xff]
    %v262 = vld [vmem:[#allocation2 + $0x158] sm:$0xff]
    %v263 = vld [vmem:[#allocation2 + $0x160] sm:$0xff]
    %v264 = vld [vmem:[#allocation2 + $0x168] sm:$0xff]
    %v265 = vld [vmem:[#allocation2 + $0x170] sm:$0xff]
    %v266 = vld [vmem:[#allocation2 + $0x178] sm:$0xff]
    %v267 = vld [vmem:[#allocation2 + $0x180] sm:$0xff]
    %v268 = vld [vmem:[#allocation2 + $0x188] sm:$0xff]
    %v269 = vld [vmem:[#allocation2 + $0x190] sm:$0xff]
    %v270 = vld [vmem:[#allocation2 + $0x198] sm:$0xff]
    %v271 = vld [vmem:[#allocation2 + $0x1a0] sm:$0xff]
    %v272 = vld [vmem:[#allocation2 + $0x1a8] sm:$0xff]
    %v273 = vld [vmem:[#allocation2 + $0x1b0] sm:$0xff]
    %v274 = vld [vmem:[#allocation2 + $0x1b8] sm:$0xff]
    %v275 = vld [vmem:[#allocation2 + $0x1c0] sm:$0xff]
    %v276 = vld [vmem:[#allocation2 + $0x1c8] sm:$0xff]
    %v277 = vld [vmem:[#allocation2 + $0x1d0] sm:$0xff]
    %v278 = vld [vmem:[#allocation2 + $0x1d8] sm:$0xff]
    %v279 = vld [vmem:[#allocation2 + $0x1e0] sm:$0xff]
    %v280 = vld [vmem:[#allocation2 + $0x1e8] sm:$0xff]
    %v281 = vld [vmem:[#allocation2 + $0x1f0] sm:$0xff]
    %v282 = vld [vmem:[#allocation2 + $0x1f8] sm:$0xff]
    %v283 = vld [vmem:[%s4 + $0x2] sm:$0xf]
    %v285 = vperm.slane %v283, 0
    %v286 = vperm.slane %v283, 1
    %v287 = vperm.slane %v283, 2
    %v288 = vperm.slane %v283, 3
    %v357 = vunpack.c.l.b16 %v219
    %v358 = vunpack.c.h.b16 %v219
    %v359 = vunpack.c.l.b16 %v220
    %v360 = vunpack.c.h.b16 %v220
    %v361 = vunpack.c.l.b16 %v221
    %v362 = vunpack.c.h.b16 %v221
    %v363 = vunpack.c.l.b16 %v222
    %v364 = vunpack.c.h.b16 %v222
    %v365 = vunpack.c.l.b16 %v223
    %v366 = vunpack.c.h.b16 %v223
    %v367 = vunpack.c.l.b16 %v224
    %v368 = vunpack.c.h.b16 %v224
    %v369 = vunpack.c.l.b16 %v225
    %v370 = vunpack.c.h.b16 %v225
    %v371 = vunpack.c.l.b16 %v226
    %v372 = vunpack.c.h.b16 %v226
    %v373 = vunpack.c.l.b16 %v227
    %v374 = vunpack.c.h.b16 %v227
    %v375 = vunpack.c.l.b16 %v228
    %v376 = vunpack.c.h.b16 %v228
    %v377 = vunpack.c.l.b16 %v229
    %v378 = vunpack.c.h.b16 %v229
    %v379 = vunpack.c.l.b16 %v230
    %v380 = vunpack.c.h.b16 %v230
    %v381 = vunpack.c.l.b16 %v231
    %v382 = vunpack.c.h.b16 %v231
    %v383 = vunpack.c.l.b16 %v232
    %v384 = vunpack.c.h.b16 %v232
    %v385 = vunpack.c.l.b16 %v233
    %v386 = vunpack.c.h.b16 %v233
    %v387 = vunpack.c.l.b16 %v234
    %v388 = vunpack.c.h.b16 %v234
    %v389 = vunpack.c.l.b16 %v235
    %v390 = vunpack.c.h.b16 %v235
    %v391 = vunpack.c.l.b16 %v236
    %v392 = vunpack.c.h.b16 %v236
    %v393 = vunpack.c.l.b16 %v237
    %v394 = vunpack.c.h.b16 %v237
    %v395 = vunpack.c.l.b16 %v238
    %v396 = vunpack.c.h.b16 %v238
    %v397 = vunpack.c.l.b16 %v239
    %v398 = vunpack.c.h.b16 %v239
    %v399 = vunpack.c.l.b16 %v240
    %v400 = vunpack.c.h.b16 %v240
    %v401 = vunpack.c.l.b16 %v241
    %v402 = vunpack.c.h.b16 %v241
    %v403 = vunpack.c.l.b16 %v242
    %v404 = vunpack.c.h.b16 %v242
    %v405 = vunpack.c.l.b16 %v243
    %v406 = vunpack.c.h.b16 %v243
    %v407 = vunpack.c.l.b16 %v244
    %v408 = vunpack.c.h.b16 %v244
    %v409 = vunpack.c.l.b16 %v245
    %v410 = vunpack.c.h.b16 %v245
    %v411 = vunpack.c.l.b16 %v246
    %v412 = vunpack.c.h.b16 %v246
    %v413 = vunpack.c.l.b16 %v247
    %v414 = vunpack.c.h.b16 %v247
    %v415 = vunpack.c.l.b16 %v248
    %v416 = vunpack.c.h.b16 %v248
    %v417 = vunpack.c.l.b16 %v249
    %v418 = vunpack.c.h.b16 %v249
    %v419 = vunpack.c.l.b16 %v250
    %v420 = vunpack.c.h.b16 %v250
    %v421 = vunpack.c.l.b16 %v251
    %v422 = vunpack.c.h.b16 %v251
    %v423 = vunpack.c.l.b16 %v252
    %v424 = vunpack.c.h.b16 %v252
    %v425 = vunpack.c.l.b16 %v253
    %v426 = vunpack.c.h.b16 %v253
    %v427 = vunpack.c.l.b16 %v254
    %v428 = vunpack.c.h.b16 %v254
    %v429 = vunpack.c.l.b16 %v255
    %v430 = vunpack.c.h.b16 %v255
    %v431 = vunpack.c.l.b16 %v256
    %v432 = vunpack.c.h.b16 %v256
    %v433 = vunpack.c.l.b16 %v257
    %v434 = vunpack.c.h.b16 %v257
    %v435 = vunpack.c.l.b16 %v258
    %v436 = vunpack.c.h.b16 %v258
    %v437 = vunpack.c.l.b16 %v259
    %v438 = vunpack.c.h.b16 %v259
    %v439 = vunpack.c.l.b16 %v260
    %v440 = vunpack.c.h.b16 %v260
    %v441 = vunpack.c.l.b16 %v261
    %v442 = vunpack.c.h.b16 %v261
    %v443 = vunpack.c.l.b16 %v262
    %v444 = vunpack.c.h.b16 %v262
    %v445 = vunpack.c.l.b16 %v263
    %v446 = vunpack.c.h.b16 %v263
    %v447 = vunpack.c.l.b16 %v264
    %v448 = vunpack.c.h.b16 %v264
    %v449 = vunpack.c.l.b16 %v265
    %v450 = vunpack.c.h.b16 %v265
    %v451 = vunpack.c.l.b16 %v266
    %v452 = vunpack.c.h.b16 %v266
    %v453 = vunpack.c.l.b16 %v267
    %v454 = vunpack.c.h.b16 %v267
    %v455 = vunpack.c.l.b16 %v268
    %v456 = vunpack.c.h.b16 %v268
    %v457 = vunpack.c.l.b16 %v269
    %v458 = vunpack.c.h.b16 %v269
    %v459 = vunpack.c.l.b16 %v270
    %v460 = vunpack.c.h.b16 %v270
    %v461 = vunpack.c.l.b16 %v271
    %v462 = vunpack.c.h.b16 %v271
    %v463 = vunpack.c.l.b16 %v272
    %v464 = vunpack.c.h.b16 %v272
    %v465 = vunpack.c.l.b16 %v273
    %v466 = vunpack.c.h.b16 %v273
    %v467 = vunpack.c.l.b16 %v274
    %v468 = vunpack.c.h.b16 %v274
    %v469 = vunpack.c.l.b16 %v275
    %v470 = vunpack.c.h.b16 %v275
    %v471 = vunpack.c.l.b16 %v276
    %v472 = vunpack.c.h.b16 %v276
    %v473 = vunpack.c.l.b16 %v277
    %v474 = vunpack.c.h.b16 %v277
    %v475 = vunpack.c.l.b16 %v278
    %v476 = vunpack.c.h.b16 %v278
    %v477 = vunpack.c.l.b16 %v279
    %v478 = vunpack.c.h.b16 %v279
    %v479 = vunpack.c.l.b16 %v280
    %v480 = vunpack.c.h.b16 %v280
    %v481 = vunpack.c.l.b16 %v281
    %v482 = vunpack.c.h.b16 %v281
    %v483 = vunpack.c.l.b16 %v282
    %v484 = vunpack.c.h.b16 %v282
    %v485 = vpack.c.b16 %v361, %v357
    %v486 = vpack.c.b16 %v362, %v358
    %v487 = vpack.c.b16 %v363, %v359
    %v488 = vpack.c.b16 %v364, %v360
    %v489 = vpack.c.b16 %v369, %v365
    %v490 = vpack.c.b16 %v370, %v366
    %v491 = vpack.c.b16 %v371, %v367
    %v492 = vpack.c.b16 %v372, %v368
    %v493 = vpack.c.b16 %v377, %v373
    %v494 = vpack.c.b16 %v378, %v374
    %v495 = vpack.c.b16 %v379, %v375
    %v496 = vpack.c.b16 %v380, %v376
    %v497 = vpack.c.b16 %v385, %v381
    %v498 = vpack.c.b16 %v386, %v382
    %v499 = vpack.c.b16 %v387, %v383
    %v500 = vpack.c.b16 %v388, %v384
    %v501 = vpack.c.b16 %v393, %v389
    %v502 = vpack.c.b16 %v394, %v390
    %v503 = vpack.c.b16 %v395, %v391
    %v504 = vpack.c.b16 %v396, %v392
    %v505 = vpack.c.b16 %v401, %v397
    %v506 = vpack.c.b16 %v402, %v398
    %v507 = vpack.c.b16 %v403, %v399
    %v508 = vpack.c.b16 %v404, %v400
    %v509 = vpack.c.b16 %v409, %v405
    %v510 = vpack.c.b16 %v410, %v406
    %v511 = vpack.c.b16 %v411, %v407
    %v512 = vpack.c.b16 %v412, %v408
    %v513 = vpack.c.b16 %v417, %v413
    %v514 = vpack.c.b16 %v418, %v414
    %v515 = vpack.c.b16 %v419, %v415
    %v516 = vpack.c.b16 %v420, %v416
    %v517 = vpack.c.b16 %v425, %v421
    %v518 = vpack.c.b16 %v426, %v422
    %v519 = vpack.c.b16 %v427, %v423
    %v520 = vpack.c.b16 %v428, %v424
    %v521 = vpack.c.b16 %v433, %v429
    %v522 = vpack.c.b16 %v434, %v430
    %v523 = vpack.c.b16 %v435, %v431
    %v524 = vpack.c.b16 %v436, %v432
    %v525 = vpack.c.b16 %v441, %v437
    %v526 = vpack.c.b16 %v442, %v438
    %v527 = vpack.c.b16 %v443, %v439
    %v528 = vpack.c.b16 %v444, %v440
    %v529 = vpack.c.b16 %v449, %v445
    %v530 = vpack.c.b16 %v450, %v446
    %v531 = vpack.c.b16 %v451, %v447
    %v532 = vpack.c.b16 %v452, %v448
    %v533 = vpack.c.b16 %v457, %v453
    %v534 = vpack.c.b16 %v458, %v454
    %v535 = vpack.c.b16 %v459, %v455
    %v536 = vpack.c.b16 %v460, %v456
    %v537 = vpack.c.b16 %v465, %v461
    %v538 = vpack.c.b16 %v466, %v462
    %v539 = vpack.c.b16 %v467, %v463
    %v540 = vpack.c.b16 %v468, %v464
    %v541 = vpack.c.b16 %v473, %v469
    %v542 = vpack.c.b16 %v474, %v470
    %v543 = vpack.c.b16 %v475, %v471
    %v544 = vpack.c.b16 %v476, %v472
    %v545 = vpack.c.b16 %v481, %v477
    %v546 = vpack.c.b16 %v482, %v478
    %v547 = vpack.c.b16 %v483, %v479
    %v548 = vpack.c.b16 %v484, %v480
    %613 = vmatpush.bf16.msra.mxu0 %v513
    %614 = vmatpush.bf16.msra.mxu0 %v509
    %615 = vmatpush.bf16.msra.mxu0 %v505
    %616 = vmatpush.bf16.msra.mxu0 %v501
    %617 = vmatpush.bf16.msra.mxu0 %v497
    %618 = vmatpush.bf16.msra.mxu0 %v493
    %619 = vmatpush.bf16.msra.mxu0 %v489
    %620 = vmatpush.bf16.msra.mxu0 %v485
    %621 = vmatmul.bf16.gmra.mxu0 %v217
    %v622 = vpop.f32.mrf.mxu0
    %v623 = vadd.f32 %v285, %v622
    %v624 = vpop.f32.mrf.mxu0
    %625 = vdwg.mxu0
    %626 = vmatpush.bf16.msra.mxu0 %v545
    %627 = vmatpush.bf16.msra.mxu0 %v541
    %628 = vmatpush.bf16.msra.mxu0 %v537
    %629 = vmatpush.bf16.msra.mxu0 %v533
    %630 = vmatpush.bf16.msra.mxu0 %v529
    %631 = vmatpush.bf16.msra.mxu0 %v525
    %632 = vmatpush.bf16.msra.mxu0 %v521
    %633 = vmatpush.bf16.msra.mxu0 %v517
    %634 = vmatmul.bf16.gmra.mxu0 %v218
    %v635 = vpop.f32.mrf.mxu0
    %v636 = vadd.f32 %v623, %v635
    %v637 = vpop.f32.mrf.mxu0
    %638 = vdwg.mxu0
    %639 = vmatpush.bf16.msra.mxu0 %v514
    %640 = vmatpush.bf16.msra.mxu0 %v510
    %641 = vmatpush.bf16.msra.mxu0 %v506
    %642 = vmatpush.bf16.msra.mxu0 %v502
    %643 = vmatpush.bf16.msra.mxu0 %v498
    %644 = vmatpush.bf16.msra.mxu0 %v494
    %645 = vmatpush.bf16.msra.mxu0 %v490
    %646 = vmatpush.bf16.msra.mxu0 %v486
    %647 = vmatmul.bf16.gmra.mxu0 %v217
    %v648 = vpop.f32.mrf.mxu0
    %v649 = vadd.f32 %v286, %v648
    %v650 = vpop.f32.mrf.mxu0
    %651 = vdwg.mxu0
    %652 = vmatpush.bf16.msra.mxu0 %v546
    %653 = vmatpush.bf16.msra.mxu0 %v542
    %654 = vmatpush.bf16.msra.mxu0 %v538
    %655 = vmatpush.bf16.msra.mxu0 %v534
    %656 = vmatpush.bf16.msra.mxu0 %v530
    %657 = vmatpush.bf16.msra.mxu0 %v526
    %658 = vmatpush.bf16.msra.mxu0 %v522
    %659 = vmatpush.bf16.msra.mxu0 %v518
    %660 = vmatmul.bf16.gmra.mxu0 %v218
    %v661 = vpop.f32.mrf.mxu0
    %v662 = vadd.f32 %v649, %v661
    %v663 = vpop.f32.mrf.mxu0
    %664 = vdwg.mxu0
    %665 = vmatpush.bf16.msra.mxu0 %v515
    %666 = vmatpush.bf16.msra.mxu0 %v511
    %667 = vmatpush.bf16.msra.mxu0 %v507
    %668 = vmatpush.bf16.msra.mxu0 %v503
    %669 = vmatpush.bf16.msra.mxu0 %v499
    %670 = vmatpush.bf16.msra.mxu0 %v495
    %671 = vmatpush.bf16.msra.mxu0 %v491
    %672 = vmatpush.bf16.msra.mxu0 %v487
    %673 = vmatmul.bf16.gmra.mxu0 %v217
    %v674 = vpop.f32.mrf.mxu0
    %v675 = vadd.f32 %v287, %v674
    %v676 = vpop.f32.mrf.mxu0
    %677 = vdwg.mxu0
    %678 = vmatpush.bf16.msra.mxu0 %v547
    %679 = vmatpush.bf16.msra.mxu0 %v543
    %680 = vmatpush.bf16.msra.mxu0 %v539
    %681 = vmatpush.bf16.msra.mxu0 %v535
    %682 = vmatpush.bf16.msra.mxu0 %v531
    %683 = vmatpush.bf16.msra.mxu0 %v527
    %684 = vmatpush.bf16.msra.mxu0 %v523
    %685 = vmatpush.bf16.msra.mxu0 %v519
    %686 = vmatmul.bf16.gmra.mxu0 %v218
    %v687 = vpop.f32.mrf.mxu0
    %v688 = vadd.f32 %v675, %v687
    %v689 = vpop.f32.mrf.mxu0
    %690 = vdwg.mxu0
    %691 = vmatpush.bf16.msra.mxu0 %v516
    %692 = vmatpush.bf16.msra.mxu0 %v512
    %693 = vmatpush.bf16.msra.mxu0 %v508
    %694 = vmatpush.bf16.msra.mxu0 %v504
    %695 = vmatpush.bf16.msra.mxu0 %v500
    %696 = vmatpush.bf16.msra.mxu0 %v496
    %697 = vmatpush.bf16.msra.mxu0 %v492
    %698 = vmatpush.bf16.msra.mxu0 %v488
    %699 = vmatmul.bf16.gmra.mxu0 %v217
    %v700 = vpop.f32.mrf.mxu0
    %v701 = vadd.f32 %v288, %v700
    %v702 = vpop.f32.mrf.mxu0
    %703 = vdwg.mxu0
    %704 = vmatpush.bf16.msra.mxu0 %v548
    %705 = vmatpush.bf16.msra.mxu0 %v544
    %706 = vmatpush.bf16.msra.mxu0 %v540
    %707 = vmatpush.bf16.msra.mxu0 %v536
    %708 = vmatpush.bf16.msra.mxu0 %v532
    %709 = vmatpush.bf16.msra.mxu0 %v528
    %710 = vmatpush.bf16.msra.mxu0 %v524
    %711 = vmatpush.bf16.msra.mxu0 %v520
    %712 = vmatmul.bf16.gmra.mxu0 %v218
    %v713 = vpop.f32.mrf.mxu0
    %v714 = vadd.f32 %v701, %v713
    %v715 = vpop.f32.mrf.mxu0
    %716 = vdwg.mxu0
    %v717 = vmax.f32 %v636, 0.0
    %v718 = vmax.f32 %v662, 0.0
    %v719 = vmax.f32 %v688, 0.0
    %v720 = vmax.f32 %v714, 0.0
    %v721 = vpack.c.bf16 %v717, %v717
    %v722 = vpack.c.bf16 %v718, %v718
    %v723 = vpack.c.bf16 %v719, %v719
    %v724 = vpack.c.bf16 %v720, %v720
    %v725 = vld [vmem:[#allocation4] sm:$0xff]
    %v726 = vld [vmem:[#allocation4 + $0x8] sm:$0xff]
    %v727 = vld [vmem:[#allocation4 + $0x10] sm:$0xff]
    %v728 = vld [vmem:[#allocation4 + $0x18] sm:$0xff]
    %v729 = vld [vmem:[#allocation4 + $0x20] sm:$0xff]
    %v730 = vld [vmem:[#allocation4 + $0x28] sm:$0xff]
    %v731 = vld [vmem:[#allocation4 + $0x30] sm:$0xff]
    %v732 = vld [vmem:[#allocation4 + $0x38] sm:$0xff]
    %v733 = vld [vmem:[#allocation4 + $0x40] sm:$0xff]
    %v734 = vld [vmem:[#allocation4 + $0x48] sm:$0xff]
    %v735 = vld [vmem:[#allocation4 + $0x50] sm:$0xff]
    %v736 = vld [vmem:[#allocation4 + $0x58] sm:$0xff]
    %v737 = vld [vmem:[#allocation4 + $0x60] sm:$0xff]
    %v738 = vld [vmem:[#allocation4 + $0x68] sm:$0xff]
    %v739 = vld [vmem:[#allocation4 + $0x70] sm:$0xff]
    %v740 = vld [vmem:[#allocation4 + $0x78] sm:$0xff]
    %v741 = vld [vmem:[#allocation4 + $0x80] sm:$0xff]
    %v742 = vld [vmem:[#allocation4 + $0x88] sm:$0xff]
    %v743 = vld [vmem:[#allocation4 + $0x90] sm:$0xff]
    %v744 = vld [vmem:[#allocation4 + $0x98] sm:$0xff]
    %v745 = vld [vmem:[#allocation4 + $0xa0] sm:$0xff]
    %v746 = vld [vmem:[#allocation4 + $0xa8] sm:$0xff]
    %v747 = vld [vmem:[#allocation4 + $0xb0] sm:$0xff]
    %v748 = vld [vmem:[#allocation4 + $0xb8] sm:$0xff]
    %v749 = vld [vmem:[#allocation4 + $0xc0] sm:$0xff]
    %v750 = vld [vmem:[#allocation4 + $0xc8] sm:$0xff]
    %v751 = vld [vmem:[#allocation4 + $0xd0] sm:$0xff]
    %v752 = vld [vmem:[#allocation4 + $0xd8] sm:$0xff]
    %v753 = vld [vmem:[#allocation4 + $0xe0] sm:$0xff]
    %v754 = vld [vmem:[#allocation4 + $0xe8] sm:$0xff]
    %v755 = vld [vmem:[#allocation4 + $0xf0] sm:$0xff]
    %v756 = vld [vmem:[#allocation4 + $0xf8] sm:$0xff]
    %v757 = vld [vmem:[#allocation4 + $0x100] sm:$0xff]
    %v758 = vld [vmem:[#allocation4 + $0x108] sm:$0xff]
    %v759 = vld [vmem:[#allocation4 + $0x110] sm:$0xff]
    %v760 = vld [vmem:[#allocation4 + $0x118] sm:$0xff]
    %v761 = vld [vmem:[#allocation4 + $0x120] sm:$0xff]
    %v762 = vld [vmem:[#allocation4 + $0x128] sm:$0xff]
    %v763 = vld [vmem:[#allocation4 + $0x130] sm:$0xff]
    %v764 = vld [vmem:[#allocation4 + $0x138] sm:$0xff]
    %v765 = vld [vmem:[#allocation4 + $0x140] sm:$0xff]
    %v766 = vld [vmem:[#allocation4 + $0x148] sm:$0xff]
    %v767 = vld [vmem:[#allocation4 + $0x150] sm:$0xff]
    %v768 = vld [vmem:[#allocation4 + $0x158] sm:$0xff]
    %v769 = vld [vmem:[#allocation4 + $0x160] sm:$0xff]
    %v770 = vld [vmem:[#allocation4 + $0x168] sm:$0xff]
    %v771 = vld [vmem:[#allocation4 + $0x170] sm:$0xff]
    %v772 = vld [vmem:[#allocation4 + $0x178] sm:$0xff]
    %v773 = vld [vmem:[#allocation4 + $0x180] sm:$0xff]
    %v774 = vld [vmem:[#allocation4 + $0x188] sm:$0xff]
    %v775 = vld [vmem:[#allocation4 + $0x190] sm:$0xff]
    %v776 = vld [vmem:[#allocation4 + $0x198] sm:$0xff]
    %v777 = vld [vmem:[#allocation4 + $0x1a0] sm:$0xff]
    %v778 = vld [vmem:[#allocation4 + $0x1a8] sm:$0xff]
    %v779 = vld [vmem:[#allocation4 + $0x1b0] sm:$0xff]
    %v780 = vld [vmem:[#allocation4 + $0x1b8] sm:$0xff]
    %v781 = vld [vmem:[#allocation4 + $0x1c0] sm:$0xff]
    %v782 = vld [vmem:[#allocation4 + $0x1c8] sm:$0xff]
    %v783 = vld [vmem:[#allocation4 + $0x1d0] sm:$0xff]
    %v784 = vld [vmem:[#allocation4 + $0x1d8] sm:$0xff]
    %v785 = vld [vmem:[#allocation4 + $0x1e0] sm:$0xff]
    %v786 = vld [vmem:[#allocation4 + $0x1e8] sm:$0xff]
    %v787 = vld [vmem:[#allocation4 + $0x1f0] sm:$0xff]
    %v788 = vld [vmem:[#allocation4 + $0x1f8] sm:$0xff]
    %v789 = vld [vmem:[#allocation4 + $0x200] sm:$0xff]
    %v790 = vld [vmem:[#allocation4 + $0x208] sm:$0xff]
    %v791 = vld [vmem:[#allocation4 + $0x210] sm:$0xff]
    %v792 = vld [vmem:[#allocation4 + $0x218] sm:$0xff]
    %v793 = vld [vmem:[#allocation4 + $0x220] sm:$0xff]
    %v794 = vld [vmem:[#allocation4 + $0x228] sm:$0xff]
    %v795 = vld [vmem:[#allocation4 + $0x230] sm:$0xff]
    %v796 = vld [vmem:[#allocation4 + $0x238] sm:$0xff]
    %v797 = vld [vmem:[#allocation4 + $0x240] sm:$0xff]
    %v798 = vld [vmem:[#allocation4 + $0x248] sm:$0xff]
    %v799 = vld [vmem:[#allocation4 + $0x250] sm:$0xff]
    %v800 = vld [vmem:[#allocation4 + $0x258] sm:$0xff]
    %v801 = vld [vmem:[#allocation4 + $0x260] sm:$0xff]
    %v802 = vld [vmem:[#allocation4 + $0x268] sm:$0xff]
    %v803 = vld [vmem:[#allocation4 + $0x270] sm:$0xff]
    %v804 = vld [vmem:[#allocation4 + $0x278] sm:$0xff]
    %v805 = vld [vmem:[#allocation4 + $0x280] sm:$0xff]
    %v806 = vld [vmem:[#allocation4 + $0x288] sm:$0xff]
    %v807 = vld [vmem:[#allocation4 + $0x290] sm:$0xff]
    %v808 = vld [vmem:[#allocation4 + $0x298] sm:$0xff]
    %v809 = vld [vmem:[#allocation4 + $0x2a0] sm:$0xff]
    %v810 = vld [vmem:[#allocation4 + $0x2a8] sm:$0xff]
    %v811 = vld [vmem:[#allocation4 + $0x2b0] sm:$0xff]
    %v812 = vld [vmem:[#allocation4 + $0x2b8] sm:$0xff]
    %v813 = vld [vmem:[#allocation4 + $0x2c0] sm:$0xff]
    %v814 = vld [vmem:[#allocation4 + $0x2c8] sm:$0xff]
    %v815 = vld [vmem:[#allocation4 + $0x2d0] sm:$0xff]
    %v816 = vld [vmem:[#allocation4 + $0x2d8] sm:$0xff]
    %v817 = vld [vmem:[#allocation4 + $0x2e0] sm:$0xff]
    %v818 = vld [vmem:[#allocation4 + $0x2e8] sm:$0xff]
    %v819 = vld [vmem:[#allocation4 + $0x2f0] sm:$0xff]
    %v820 = vld [vmem:[#allocation4 + $0x2f8] sm:$0xff]
    %v821 = vld [vmem:[#allocation4 + $0x300] sm:$0xff]
    %v822 = vld [vmem:[#allocation4 + $0x308] sm:$0xff]
    %v823 = vld [vmem:[#allocation4 + $0x310] sm:$0xff]
    %v824 = vld [vmem:[#allocation4 + $0x318] sm:$0xff]
    %v825 = vld [vmem:[#allocation4 + $0x320] sm:$0xff]
    %v826 = vld [vmem:[#allocation4 + $0x328] sm:$0xff]
    %v827 = vld [vmem:[#allocation4 + $0x330] sm:$0xff]
    %v828 = vld [vmem:[#allocation4 + $0x338] sm:$0xff]
    %v829 = vld [vmem:[#allocation4 + $0x340] sm:$0xff]
    %v830 = vld [vmem:[#allocation4 + $0x348] sm:$0xff]
    %v831 = vld [vmem:[#allocation4 + $0x350] sm:$0xff]
    %v832 = vld [vmem:[#allocation4 + $0x358] sm:$0xff]
    %v833 = vld [vmem:[#allocation4 + $0x360] sm:$0xff]
    %v834 = vld [vmem:[#allocation4 + $0x368] sm:$0xff]
    %v835 = vld [vmem:[#allocation4 + $0x370] sm:$0xff]
    %v836 = vld [vmem:[#allocation4 + $0x378] sm:$0xff]
    %v837 = vld [vmem:[#allocation4 + $0x380] sm:$0xff]
    %v838 = vld [vmem:[#allocation4 + $0x388] sm:$0xff]
    %v839 = vld [vmem:[#allocation4 + $0x390] sm:$0xff]
    %v840 = vld [vmem:[#allocation4 + $0x398] sm:$0xff]
    %v841 = vld [vmem:[#allocation4 + $0x3a0] sm:$0xff]
    %v842 = vld [vmem:[#allocation4 + $0x3a8] sm:$0xff]
    %v843 = vld [vmem:[#allocation4 + $0x3b0] sm:$0xff]
    %v844 = vld [vmem:[#allocation4 + $0x3b8] sm:$0xff]
    %v845 = vld [vmem:[#allocation4 + $0x3c0] sm:$0xff]
    %v846 = vld [vmem:[#allocation4 + $0x3c8] sm:$0xff]
    %v847 = vld [vmem:[#allocation4 + $0x3d0] sm:$0xff]
    %v848 = vld [vmem:[#allocation4 + $0x3d8] sm:$0xff]
    %v849 = vld [vmem:[#allocation4 + $0x3e0] sm:$0xff]
    %v850 = vld [vmem:[#allocation4 + $0x3e8] sm:$0xff]
    %v851 = vld [vmem:[#allocation4 + $0x3f0] sm:$0xff]
    %v852 = vld [vmem:[#allocation4 + $0x3f8] sm:$0xff]
    %v853 = vld [vmem:[%s4 + $0x6] sm:$0xf]
    %v855 = vperm.slane %v853, 0
    %v856 = vperm.slane %v853, 1
    %v857 = vperm.slane %v853, 2
    %v858 = vperm.slane %v853, 3
    %v991 = vunpack.c.l.b16 %v725
    %v992 = vunpack.c.h.b16 %v725
    %v993 = vunpack.c.l.b16 %v726
    %v994 = vunpack.c.h.b16 %v726
    %v995 = vunpack.c.l.b16 %v727
    %v996 = vunpack.c.h.b16 %v727
    %v997 = vunpack.c.l.b16 %v728
    %v998 = vunpack.c.h.b16 %v728
    %v999 = vunpack.c.l.b16 %v729
    %v1000 = vunpack.c.h.b16 %v729
    %v1001 = vunpack.c.l.b16 %v730
    %v1002 = vunpack.c.h.b16 %v730
    %v1003 = vunpack.c.l.b16 %v731
    %v1004 = vunpack.c.h.b16 %v731
    %v1005 = vunpack.c.l.b16 %v732
    %v1006 = vunpack.c.h.b16 %v732
    %v1007 = vunpack.c.l.b16 %v733
    %v1008 = vunpack.c.h.b16 %v733
    %v1009 = vunpack.c.l.b16 %v734
    %v1010 = vunpack.c.h.b16 %v734
    %v1011 = vunpack.c.l.b16 %v735
    %v1012 = vunpack.c.h.b16 %v735
    %v1013 = vunpack.c.l.b16 %v736
    %v1014 = vunpack.c.h.b16 %v736
    %v1015 = vunpack.c.l.b16 %v737
    %v1016 = vunpack.c.h.b16 %v737
    %v1017 = vunpack.c.l.b16 %v738
    %v1018 = vunpack.c.h.b16 %v738
    %v1019 = vunpack.c.l.b16 %v739
    %v1020 = vunpack.c.h.b16 %v739
    %v1021 = vunpack.c.l.b16 %v740
    %v1022 = vunpack.c.h.b16 %v740
    %v1023 = vunpack.c.l.b16 %v741
    %v1024 = vunpack.c.h.b16 %v741
    %v1025 = vunpack.c.l.b16 %v742
    %v1026 = vunpack.c.h.b16 %v742
    %v1027 = vunpack.c.l.b16 %v743
    %v1028 = vunpack.c.h.b16 %v743
    %v1029 = vunpack.c.l.b16 %v744
    %v1030 = vunpack.c.h.b16 %v744
    %v1031 = vunpack.c.l.b16 %v745
    %v1032 = vunpack.c.h.b16 %v745
    %v1033 = vunpack.c.l.b16 %v746
    %v1034 = vunpack.c.h.b16 %v746
    %v1035 = vunpack.c.l.b16 %v747
    %v1036 = vunpack.c.h.b16 %v747
    %v1037 = vunpack.c.l.b16 %v748
    %v1038 = vunpack.c.h.b16 %v748
    %v1039 = vunpack.c.l.b16 %v749
    %v1040 = vunpack.c.h.b16 %v749
    %v1041 = vunpack.c.l.b16 %v750
    %v1042 = vunpack.c.h.b16 %v750
    %v1043 = vunpack.c.l.b16 %v751
    %v1044 = vunpack.c.h.b16 %v751
    %v1045 = vunpack.c.l.b16 %v752
    %v1046 = vunpack.c.h.b16 %v752
    %v1047 = vunpack.c.l.b16 %v753
    %v1048 = vunpack.c.h.b16 %v753
    %v1049 = vunpack.c.l.b16 %v754
    %v1050 = vunpack.c.h.b16 %v754
    %v1051 = vunpack.c.l.b16 %v755
    %v1052 = vunpack.c.h.b16 %v755
    %v1053 = vunpack.c.l.b16 %v756
    %v1054 = vunpack.c.h.b16 %v756
    %v1055 = vunpack.c.l.b16 %v757
    %v1056 = vunpack.c.h.b16 %v757
    %v1057 = vunpack.c.l.b16 %v758
    %v1058 = vunpack.c.h.b16 %v758
    %v1059 = vunpack.c.l.b16 %v759
    %v1060 = vunpack.c.h.b16 %v759
    %v1061 = vunpack.c.l.b16 %v760
    %v1062 = vunpack.c.h.b16 %v760
    %v1063 = vunpack.c.l.b16 %v761
    %v1064 = vunpack.c.h.b16 %v761
    %v1065 = vunpack.c.l.b16 %v762
    %v1066 = vunpack.c.h.b16 %v762
    %v1067 = vunpack.c.l.b16 %v763
    %v1068 = vunpack.c.h.b16 %v763
    %v1069 = vunpack.c.l.b16 %v764
    %v1070 = vunpack.c.h.b16 %v764
    %v1071 = vunpack.c.l.b16 %v765
    %v1072 = vunpack.c.h.b16 %v765
    %v1073 = vunpack.c.l.b16 %v766
    %v1074 = vunpack.c.h.b16 %v766
    %v1075 = vunpack.c.l.b16 %v767
    %v1076 = vunpack.c.h.b16 %v767
    %v1077 = vunpack.c.l.b16 %v768
    %v1078 = vunpack.c.h.b16 %v768
    %v1079 = vunpack.c.l.b16 %v769
    %v1080 = vunpack.c.h.b16 %v769
    %v1081 = vunpack.c.l.b16 %v770
    %v1082 = vunpack.c.h.b16 %v770
    %v1083 = vunpack.c.l.b16 %v771
    %v1084 = vunpack.c.h.b16 %v771
    %v1085 = vunpack.c.l.b16 %v772
    %v1086 = vunpack.c.h.b16 %v772
    %v1087 = vunpack.c.l.b16 %v773
    %v1088 = vunpack.c.h.b16 %v773
    %v1089 = vunpack.c.l.b16 %v774
    %v1090 = vunpack.c.h.b16 %v774
    %v1091 = vunpack.c.l.b16 %v775
    %v1092 = vunpack.c.h.b16 %v775
    %v1093 = vunpack.c.l.b16 %v776
    %v1094 = vunpack.c.h.b16 %v776
    %v1095 = vunpack.c.l.b16 %v777
    %v1096 = vunpack.c.h.b16 %v777
    %v1097 = vunpack.c.l.b16 %v778
    %v1098 = vunpack.c.h.b16 %v778
    %v1099 = vunpack.c.l.b16 %v779
    %v1100 = vunpack.c.h.b16 %v779
    %v1101 = vunpack.c.l.b16 %v780
    %v1102 = vunpack.c.h.b16 %v780
    %v1103 = vunpack.c.l.b16 %v781
    %v1104 = vunpack.c.h.b16 %v781
    %v1105 = vunpack.c.l.b16 %v782
    %v1106 = vunpack.c.h.b16 %v782
    %v1107 = vunpack.c.l.b16 %v783
    %v1108 = vunpack.c.h.b16 %v783
    %v1109 = vunpack.c.l.b16 %v784
    %v1110 = vunpack.c.h.b16 %v784
    %v1111 = vunpack.c.l.b16 %v785
    %v1112 = vunpack.c.h.b16 %v785
    %v1113 = vunpack.c.l.b16 %v786
    %v1114 = vunpack.c.h.b16 %v786
    %v1115 = vunpack.c.l.b16 %v787
    %v1116 = vunpack.c.h.b16 %v787
    %v1117 = vunpack.c.l.b16 %v788
    %v1118 = vunpack.c.h.b16 %v788
    %v1119 = vunpack.c.l.b16 %v789
    %v1120 = vunpack.c.h.b16 %v789
    %v1121 = vunpack.c.l.b16 %v790
    %v1122 = vunpack.c.h.b16 %v790
    %v1123 = vunpack.c.l.b16 %v791
    %v1124 = vunpack.c.h.b16 %v791
    %v1125 = vunpack.c.l.b16 %v792
    %v1126 = vunpack.c.h.b16 %v792
    %v1127 = vunpack.c.l.b16 %v793
    %v1128 = vunpack.c.h.b16 %v793
    %v1129 = vunpack.c.l.b16 %v794
    %v1130 = vunpack.c.h.b16 %v794
    %v1131 = vunpack.c.l.b16 %v795
    %v1132 = vunpack.c.h.b16 %v795
    %v1133 = vunpack.c.l.b16 %v796
    %v1134 = vunpack.c.h.b16 %v796
    %v1135 = vunpack.c.l.b16 %v797
    %v1136 = vunpack.c.h.b16 %v797
    %v1137 = vunpack.c.l.b16 %v798
    %v1138 = vunpack.c.h.b16 %v798
    %v1139 = vunpack.c.l.b16 %v799
    %v1140 = vunpack.c.h.b16 %v799
    %v1141 = vunpack.c.l.b16 %v800
    %v1142 = vunpack.c.h.b16 %v800
    %v1143 = vunpack.c.l.b16 %v801
    %v1144 = vunpack.c.h.b16 %v801
    %v1145 = vunpack.c.l.b16 %v802
    %v1146 = vunpack.c.h.b16 %v802
    %v1147 = vunpack.c.l.b16 %v803
    %v1148 = vunpack.c.h.b16 %v803
    %v1149 = vunpack.c.l.b16 %v804
    %v1150 = vunpack.c.h.b16 %v804
    %v1151 = vunpack.c.l.b16 %v805
    %v1152 = vunpack.c.h.b16 %v805
    %v1153 = vunpack.c.l.b16 %v806
    %v1154 = vunpack.c.h.b16 %v806
    %v1155 = vunpack.c.l.b16 %v807
    %v1156 = vunpack.c.h.b16 %v807
    %v1157 = vunpack.c.l.b16 %v808
    %v1158 = vunpack.c.h.b16 %v808
    %v1159 = vunpack.c.l.b16 %v809
    %v1160 = vunpack.c.h.b16 %v809
    %v1161 = vunpack.c.l.b16 %v810
    %v1162 = vunpack.c.h.b16 %v810
    %v1163 = vunpack.c.l.b16 %v811
    %v1164 = vunpack.c.h.b16 %v811
    %v1165 = vunpack.c.l.b16 %v812
    %v1166 = vunpack.c.h.b16 %v812
    %v1167 = vunpack.c.l.b16 %v813
    %v1168 = vunpack.c.h.b16 %v813
    %v1169 = vunpack.c.l.b16 %v814
    %v1170 = vunpack.c.h.b16 %v814
    %v1171 = vunpack.c.l.b16 %v815
    %v1172 = vunpack.c.h.b16 %v815
    %v1173 = vunpack.c.l.b16 %v816
    %v1174 = vunpack.c.h.b16 %v816
    %v1175 = vunpack.c.l.b16 %v817
    %v1176 = vunpack.c.h.b16 %v817
    %v1177 = vunpack.c.l.b16 %v818
    %v1178 = vunpack.c.h.b16 %v818
    %v1179 = vunpack.c.l.b16 %v819
    %v1180 = vunpack.c.h.b16 %v819
    %v1181 = vunpack.c.l.b16 %v820
    %v1182 = vunpack.c.h.b16 %v820
    %v1183 = vunpack.c.l.b16 %v821
    %v1184 = vunpack.c.h.b16 %v821
    %v1185 = vunpack.c.l.b16 %v822
    %v1186 = vunpack.c.h.b16 %v822
    %v1187 = vunpack.c.l.b16 %v823
    %v1188 = vunpack.c.h.b16 %v823
    %v1189 = vunpack.c.l.b16 %v824
    %v1190 = vunpack.c.h.b16 %v824
    %v1191 = vunpack.c.l.b16 %v825
    %v1192 = vunpack.c.h.b16 %v825
    %v1193 = vunpack.c.l.b16 %v826
    %v1194 = vunpack.c.h.b16 %v826
    %v1195 = vunpack.c.l.b16 %v827
    %v1196 = vunpack.c.h.b16 %v827
    %v1197 = vunpack.c.l.b16 %v828
    %v1198 = vunpack.c.h.b16 %v828
    %v1199 = vunpack.c.l.b16 %v829
    %v1200 = vunpack.c.h.b16 %v829
    %v1201 = vunpack.c.l.b16 %v830
    %v1202 = vunpack.c.h.b16 %v830
    %v1203 = vunpack.c.l.b16 %v831
    %v1204 = vunpack.c.h.b16 %v831
    %v1205 = vunpack.c.l.b16 %v832
    %v1206 = vunpack.c.h.b16 %v832
    %v1207 = vunpack.c.l.b16 %v833
    %v1208 = vunpack.c.h.b16 %v833
    %v1209 = vunpack.c.l.b16 %v834
    %v1210 = vunpack.c.h.b16 %v834
    %v1211 = vunpack.c.l.b16 %v835
    %v1212 = vunpack.c.h.b16 %v835
    %v1213 = vunpack.c.l.b16 %v836
    %v1214 = vunpack.c.h.b16 %v836
    %v1215 = vunpack.c.l.b16 %v837
    %v1216 = vunpack.c.h.b16 %v837
    %v1217 = vunpack.c.l.b16 %v838
    %v1218 = vunpack.c.h.b16 %v838
    %v1219 = vunpack.c.l.b16 %v839
    %v1220 = vunpack.c.h.b16 %v839
    %v1221 = vunpack.c.l.b16 %v840
    %v1222 = vunpack.c.h.b16 %v840
    %v1223 = vunpack.c.l.b16 %v841
    %v1224 = vunpack.c.h.b16 %v841
    %v1225 = vunpack.c.l.b16 %v842
    %v1226 = vunpack.c.h.b16 %v842
    %v1227 = vunpack.c.l.b16 %v843
    %v1228 = vunpack.c.h.b16 %v843
    %v1229 = vunpack.c.l.b16 %v844
    %v1230 = vunpack.c.h.b16 %v844
    %v1231 = vunpack.c.l.b16 %v845
    %v1232 = vunpack.c.h.b16 %v845
    %v1233 = vunpack.c.l.b16 %v846
    %v1234 = vunpack.c.h.b16 %v846
    %v1235 = vunpack.c.l.b16 %v847
    %v1236 = vunpack.c.h.b16 %v847
    %v1237 = vunpack.c.l.b16 %v848
    %v1238 = vunpack.c.h.b16 %v848
    %v1239 = vunpack.c.l.b16 %v849
    %v1240 = vunpack.c.h.b16 %v849
    %v1241 = vunpack.c.l.b16 %v850
    %v1242 = vunpack.c.h.b16 %v850
    %v1243 = vunpack.c.l.b16 %v851
    %v1244 = vunpack.c.h.b16 %v851
    %v1245 = vunpack.c.l.b16 %v852
    %v1246 = vunpack.c.h.b16 %v852
    %v1247 = vpack.c.b16 %v995, %v991
    %v1248 = vpack.c.b16 %v996, %v992
    %v1249 = vpack.c.b16 %v997, %v993
    %v1250 = vpack.c.b16 %v998, %v994
    %v1251 = vpack.c.b16 %v1003, %v999
    %v1252 = vpack.c.b16 %v1004, %v1000
    %v1253 = vpack.c.b16 %v1005, %v1001
    %v1254 = vpack.c.b16 %v1006, %v1002
    %v1255 = vpack.c.b16 %v1011, %v1007
    %v1256 = vpack.c.b16 %v1012, %v1008
    %v1257 = vpack.c.b16 %v1013, %v1009
    %v1258 = vpack.c.b16 %v1014, %v1010
    %v1259 = vpack.c.b16 %v1019, %v1015
    %v1260 = vpack.c.b16 %v1020, %v1016
    %v1261 = vpack.c.b16 %v1021, %v1017
    %v1262 = vpack.c.b16 %v1022, %v1018
    %v1263 = vpack.c.b16 %v1027, %v1023
    %v1264 = vpack.c.b16 %v1028, %v1024
    %v1265 = vpack.c.b16 %v1029, %v1025
    %v1266 = vpack.c.b16 %v1030, %v1026
    %v1267 = vpack.c.b16 %v1035, %v1031
    %v1268 = vpack.c.b16 %v1036, %v1032
    %v1269 = vpack.c.b16 %v1037, %v1033
    %v1270 = vpack.c.b16 %v1038, %v1034
    %v1271 = vpack.c.b16 %v1043, %v1039
    %v1272 = vpack.c.b16 %v1044, %v1040
    %v1273 = vpack.c.b16 %v1045, %v1041
    %v1274 = vpack.c.b16 %v1046, %v1042
    %v1275 = vpack.c.b16 %v1051, %v1047
    %v1276 = vpack.c.b16 %v1052, %v1048
    %v1277 = vpack.c.b16 %v1053, %v1049
    %v1278 = vpack.c.b16 %v1054, %v1050
    %v1279 = vpack.c.b16 %v1059, %v1055
    %v1280 = vpack.c.b16 %v1060, %v1056
    %v1281 = vpack.c.b16 %v1061, %v1057
    %v1282 = vpack.c.b16 %v1062, %v1058
    %v1283 = vpack.c.b16 %v1067, %v1063
    %v1284 = vpack.c.b16 %v1068, %v1064
    %v1285 = vpack.c.b16 %v1069, %v1065
    %v1286 = vpack.c.b16 %v1070, %v1066
    %v1287 = vpack.c.b16 %v1075, %v1071
    %v1288 = vpack.c.b16 %v1076, %v1072
    %v1289 = vpack.c.b16 %v1077, %v1073
    %v1290 = vpack.c.b16 %v1078, %v1074
    %v1291 = vpack.c.b16 %v1083, %v1079
    %v1292 = vpack.c.b16 %v1084, %v1080
    %v1293 = vpack.c.b16 %v1085, %v1081
    %v1294 = vpack.c.b16 %v1086, %v1082
    %v1295 = vpack.c.b16 %v1091, %v1087
    %v1296 = vpack.c.b16 %v1092, %v1088
    %v1297 = vpack.c.b16 %v1093, %v1089
    %v1298 = vpack.c.b16 %v1094, %v1090
    %v1299 = vpack.c.b16 %v1099, %v1095
    %v1300 = vpack.c.b16 %v1100, %v1096
    %v1301 = vpack.c.b16 %v1101, %v1097
    %v1302 = vpack.c.b16 %v1102, %v1098
    %v1303 = vpack.c.b16 %v1107, %v1103
    %v1304 = vpack.c.b16 %v1108, %v1104
    %v1305 = vpack.c.b16 %v1109, %v1105
    %v1306 = vpack.c.b16 %v1110, %v1106
    %v1307 = vpack.c.b16 %v1115, %v1111
    %v1308 = vpack.c.b16 %v1116, %v1112
    %v1309 = vpack.c.b16 %v1117, %v1113
    %v1310 = vpack.c.b16 %v1118, %v1114
    %v1311 = vpack.c.b16 %v1123, %v1119
    %v1312 = vpack.c.b16 %v1124, %v1120
    %v1313 = vpack.c.b16 %v1125, %v1121
    %v1314 = vpack.c.b16 %v1126, %v1122
    %v1315 = vpack.c.b16 %v1131, %v1127
    %v1316 = vpack.c.b16 %v1132, %v1128
    %v1317 = vpack.c.b16 %v1133, %v1129
    %v1318 = vpack.c.b16 %v1134, %v1130
    %v1319 = vpack.c.b16 %v1139, %v1135
    %v1320 = vpack.c.b16 %v1140, %v1136
    %v1321 = vpack.c.b16 %v1141, %v1137
    %v1322 = vpack.c.b16 %v1142, %v1138
    %v1323 = vpack.c.b16 %v1147, %v1143
    %v1324 = vpack.c.b16 %v1148, %v1144
    %v1325 = vpack.c.b16 %v1149, %v1145
    %v1326 = vpack.c.b16 %v1150, %v1146
    %v1327 = vpack.c.b16 %v1155, %v1151
    %v1328 = vpack.c.b16 %v1156, %v1152
    %v1329 = vpack.c.b16 %v1157, %v1153
    %v1330 = vpack.c.b16 %v1158, %v1154
    %v1331 = vpack.c.b16 %v1163, %v1159
    %v1332 = vpack.c.b16 %v1164, %v1160
    %v1333 = vpack.c.b16 %v1165, %v1161
    %v1334 = vpack.c.b16 %v1166, %v1162
    %v1335 = vpack.c.b16 %v1171, %v1167
    %v1336 = vpack.c.b16 %v1172, %v1168
    %v1337 = vpack.c.b16 %v1173, %v1169
    %v1338 = vpack.c.b16 %v1174, %v1170
    %v1339 = vpack.c.b16 %v1179, %v1175
    %v1340 = vpack.c.b16 %v1180, %v1176
    %v1341 = vpack.c.b16 %v1181, %v1177
    %v1342 = vpack.c.b16 %v1182, %v1178
    %v1343 = vpack.c.b16 %v1187, %v1183
    %v1344 = vpack.c.b16 %v1188, %v1184
    %v1345 = vpack.c.b16 %v1189, %v1185
    %v1346 = vpack.c.b16 %v1190, %v1186
    %v1347 = vpack.c.b16 %v1195, %v1191
    %v1348 = vpack.c.b16 %v1196, %v1192
    %v1349 = vpack.c.b16 %v1197, %v1193
    %v1350 = vpack.c.b16 %v1198, %v1194
    %v1351 = vpack.c.b16 %v1203, %v1199
    %v1352 = vpack.c.b16 %v1204, %v1200
    %v1353 = vpack.c.b16 %v1205, %v1201
    %v1354 = vpack.c.b16 %v1206, %v1202
    %v1355 = vpack.c.b16 %v1211, %v1207
    %v1356 = vpack.c.b16 %v1212, %v1208
    %v1357 = vpack.c.b16 %v1213, %v1209
    %v1358 = vpack.c.b16 %v1214, %v1210
    %v1359 = vpack.c.b16 %v1219, %v1215
    %v1360 = vpack.c.b16 %v1220, %v1216
    %v1361 = vpack.c.b16 %v1221, %v1217
    %v1362 = vpack.c.b16 %v1222, %v1218
    %v1363 = vpack.c.b16 %v1227, %v1223
    %v1364 = vpack.c.b16 %v1228, %v1224
    %v1365 = vpack.c.b16 %v1229, %v1225
    %v1366 = vpack.c.b16 %v1230, %v1226
    %v1367 = vpack.c.b16 %v1235, %v1231
    %v1368 = vpack.c.b16 %v1236, %v1232
    %v1369 = vpack.c.b16 %v1237, %v1233
    %v1370 = vpack.c.b16 %v1238, %v1234
    %v1371 = vpack.c.b16 %v1243, %v1239
    %v1372 = vpack.c.b16 %v1244, %v1240
    %v1373 = vpack.c.b16 %v1245, %v1241
    %v1374 = vpack.c.b16 %v1246, %v1242
    %1503 = vmatpush.bf16.msra.mxu0 %v1275
    %1504 = vmatpush.bf16.msra.mxu0 %v1271
    %1505 = vmatpush.bf16.msra.mxu0 %v1267
    %1506 = vmatpush.bf16.msra.mxu0 %v1263
    %1507 = vmatpush.bf16.msra.mxu0 %v1259
    %1508 = vmatpush.bf16.msra.mxu0 %v1255
    %1509 = vmatpush.bf16.msra.mxu0 %v1251
    %1510 = vmatpush.bf16.msra.mxu0 %v1247
    %1511 = vmatmul.bf16.gmra.mxu0 %v721
    %v1512 = vpop.f32.mrf.mxu0
    %v1513 = vadd.f32 %v855, %v1512
    %v1514 = vpop.f32.mrf.mxu0
    %1515 = vdwg.mxu0
    %1516 = vmatpush.bf16.msra.mxu0 %v1307
    %1517 = vmatpush.bf16.msra.mxu0 %v1303
    %1518 = vmatpush.bf16.msra.mxu0 %v1299
    %1519 = vmatpush.bf16.msra.mxu0 %v1295
    %1520 = vmatpush.bf16.msra.mxu0 %v1291
    %1521 = vmatpush.bf16.msra.mxu0 %v1287
    %1522 = vmatpush.bf16.msra.mxu0 %v1283
    %1523 = vmatpush.bf16.msra.mxu0 %v1279
    %1524 = vmatmul.bf16.gmra.mxu0 %v722
    %v1525 = vpop.f32.mrf.mxu0
    %v1526 = vadd.f32 %v1513, %v1525
    %v1527 = vpop.f32.mrf.mxu0
    %1528 = vdwg.mxu0
    %1529 = vmatpush.bf16.msra.mxu0 %v1339
    %1530 = vmatpush.bf16.msra.mxu0 %v1335
    %1531 = vmatpush.bf16.msra.mxu0 %v1331
    %1532 = vmatpush.bf16.msra.mxu0 %v1327
    %1533 = vmatpush.bf16.msra.mxu0 %v1323
    %1534 = vmatpush.bf16.msra.mxu0 %v1319
    %1535 = vmatpush.bf16.msra.mxu0 %v1315
    %1536 = vmatpush.bf16.msra.mxu0 %v1311
    %1537 = vmatmul.bf16.gmra.mxu0 %v723
    %v1538 = vpop.f32.mrf.mxu0
    %v1539 = vadd.f32 %v1526, %v1538
    %v1540 = vpop.f32.mrf.mxu0
    %1541 = vdwg.mxu0
    %1542 = vmatpush.bf16.msra.mxu0 %v1371
    %1543 = vmatpush.bf16.msra.mxu0 %v1367
    %1544 = vmatpush.bf16.msra.mxu0 %v1363
    %1545 = vmatpush.bf16.msra.mxu0 %v1359
    %1546 = vmatpush.bf16.msra.mxu0 %v1355
    %1547 = vmatpush.bf16.msra.mxu0 %v1351
    %1548 = vmatpush.bf16.msra.mxu0 %v1347
    %1549 = vmatpush.bf16.msra.mxu0 %v1343
    %1550 = vmatmul.bf16.gmra.mxu0 %v724
    %v1551 = vpop.f32.mrf.mxu0
    %v1552 = vadd.f32 %v1539, %v1551
    %v1553 = vpop.f32.mrf.mxu0
    %1554 = vdwg.mxu0
    %1555 = vmatpush.bf16.msra.mxu0 %v1276
    %1556 = vmatpush.bf16.msra.mxu0 %v1272
    %1557 = vmatpush.bf16.msra.mxu0 %v1268
    %1558 = vmatpush.bf16.msra.mxu0 %v1264
    %1559 = vmatpush.bf16.msra.mxu0 %v1260
    %1560 = vmatpush.bf16.msra.mxu0 %v1256
    %1561 = vmatpush.bf16.msra.mxu0 %v1252
    %1562 = vmatpush.bf16.msra.mxu0 %v1248
    %1563 = vmatmul.bf16.gmra.mxu0 %v721
    %v1564 = vpop.f32.mrf.mxu0
    %v1565 = vadd.f32 %v856, %v1564
    %v1566 = vpop.f32.mrf.mxu0
    %1567 = vdwg.mxu0
    %1568 = vmatpush.bf16.msra.mxu0 %v1308
    %1569 = vmatpush.bf16.msra.mxu0 %v1304
    %1570 = vmatpush.bf16.msra.mxu0 %v1300
    %1571 = vmatpush.bf16.msra.mxu0 %v1296
    %1572 = vmatpush.bf16.msra.mxu0 %v1292
    %1573 = vmatpush.bf16.msra.mxu0 %v1288
    %1574 = vmatpush.bf16.msra.mxu0 %v1284
    %1575 = vmatpush.bf16.msra.mxu0 %v1280
    %1576 = vmatmul.bf16.gmra.mxu0 %v722
    %v1577 = vpop.f32.mrf.mxu0
    %v1578 = vadd.f32 %v1565, %v1577
    %v1579 = vpop.f32.mrf.mxu0
    %1580 = vdwg.mxu0
    %1581 = vmatpush.bf16.msra.mxu0 %v1340
    %1582 = vmatpush.bf16.msra.mxu0 %v1336
    %1583 = vmatpush.bf16.msra.mxu0 %v1332
    %1584 = vmatpush.bf16.msra.mxu0 %v1328
    %1585 = vmatpush.bf16.msra.mxu0 %v1324
    %1586 = vmatpush.bf16.msra.mxu0 %v1320
    %1587 = vmatpush.bf16.msra.mxu0 %v1316
    %1588 = vmatpush.bf16.msra.mxu0 %v1312
    %1589 = vmatmul.bf16.gmra.mxu0 %v723
    %v1590 = vpop.f32.mrf.mxu0
    %v1591 = vadd.f32 %v1578, %v1590
    %v1592 = vpop.f32.mrf.mxu0
    %1593 = vdwg.mxu0
    %1594 = vmatpush.bf16.msra.mxu0 %v1372
    %1595 = vmatpush.bf16.msra.mxu0 %v1368
    %1596 = vmatpush.bf16.msra.mxu0 %v1364
    %1597 = vmatpush.bf16.msra.mxu0 %v1360
    %1598 = vmatpush.bf16.msra.mxu0 %v1356
    %1599 = vmatpush.bf16.msra.mxu0 %v1352
    %1600 = vmatpush.bf16.msra.mxu0 %v1348
    %1601 = vmatpush.bf16.msra.mxu0 %v1344
    %1602 = vmatmul.bf16.gmra.mxu0 %v724
    %v1603 = vpop.f32.mrf.mxu0
    %v1604 = vadd.f32 %v1591, %v1603
    %v1605 = vpop.f32.mrf.mxu0
    %1606 = vdwg.mxu0
    %1607 = vmatpush.bf16.msra.mxu0 %v1277
    %1608 = vmatpush.bf16.msra.mxu0 %v1273
    %1609 = vmatpush.bf16.msra.mxu0 %v1269
    %1610 = vmatpush.bf16.msra.mxu0 %v1265
    %1611 = vmatpush.bf16.msra.mxu0 %v1261
    %1612 = vmatpush.bf16.msra.mxu0 %v1257
    %1613 = vmatpush.bf16.msra.mxu0 %v1253
    %1614 = vmatpush.bf16.msra.mxu0 %v1249
    %1615 = vmatmul.bf16.gmra.mxu0 %v721
    %v1616 = vpop.f32.mrf.mxu0
    %v1617 = vadd.f32 %v857, %v1616
    %v1618 = vpop.f32.mrf.mxu0
    %1619 = vdwg.mxu0
    %1620 = vmatpush.bf16.msra.mxu0 %v1309
    %1621 = vmatpush.bf16.msra.mxu0 %v1305
    %1622 = vmatpush.bf16.msra.mxu0 %v1301
    %1623 = vmatpush.bf16.msra.mxu0 %v1297
    %1624 = vmatpush.bf16.msra.mxu0 %v1293
    %1625 = vmatpush.bf16.msra.mxu0 %v1289
    %1626 = vmatpush.bf16.msra.mxu0 %v1285
    %1627 = vmatpush.bf16.msra.mxu0 %v1281
    %1628 = vmatmul.bf16.gmra.mxu0 %v722
    %v1629 = vpop.f32.mrf.mxu0
    %v1630 = vadd.f32 %v1617, %v1629
    %v1631 = vpop.f32.mrf.mxu0
    %1632 = vdwg.mxu0
    %1633 = vmatpush.bf16.msra.mxu0 %v1341
    %1634 = vmatpush.bf16.msra.mxu0 %v1337
    %1635 = vmatpush.bf16.msra.mxu0 %v1333
    %1636 = vmatpush.bf16.msra.mxu0 %v1329
    %1637 = vmatpush.bf16.msra.mxu0 %v1325
    %1638 = vmatpush.bf16.msra.mxu0 %v1321
    %1639 = vmatpush.bf16.msra.mxu0 %v1317
    %1640 = vmatpush.bf16.msra.mxu0 %v1313
    %1641 = vmatmul.bf16.gmra.mxu0 %v723
    %v1642 = vpop.f32.mrf.mxu0
    %v1643 = vadd.f32 %v1630, %v1642
    %v1644 = vpop.f32.mrf.mxu0
    %1645 = vdwg.mxu0
    %1646 = vmatpush.bf16.msra.mxu0 %v1373
    %1647 = vmatpush.bf16.msra.mxu0 %v1369
    %1648 = vmatpush.bf16.msra.mxu0 %v1365
    %1649 = vmatpush.bf16.msra.mxu0 %v1361
    %1650 = vmatpush.bf16.msra.mxu0 %v1357
    %1651 = vmatpush.bf16.msra.mxu0 %v1353
    %1652 = vmatpush.bf16.msra.mxu0 %v1349
    %1653 = vmatpush.bf16.msra.mxu0 %v1345
    %1654 = vmatmul.bf16.gmra.mxu0 %v724
    %v1655 = vpop.f32.mrf.mxu0
    %v1656 = vadd.f32 %v1643, %v1655
    %v1657 = vpop.f32.mrf.mxu0
    %1658 = vdwg.mxu0
    %1659 = vmatpush.bf16.msra.mxu0 %v1278
    %1660 = vmatpush.bf16.msra.mxu0 %v1274
    %1661 = vmatpush.bf16.msra.mxu0 %v1270
    %1662 = vmatpush.bf16.msra.mxu0 %v1266
    %1663 = vmatpush.bf16.msra.mxu0 %v1262
    %1664 = vmatpush.bf16.msra.mxu0 %v1258
    %1665 = vmatpush.bf16.msra.mxu0 %v1254
    %1666 = vmatpush.bf16.msra.mxu0 %v1250
    %1667 = vmatmul.bf16.gmra.mxu0 %v721
    %v1668 = vpop.f32.mrf.mxu0
    %v1669 = vadd.f32 %v858, %v1668
    %v1670 = vpop.f32.mrf.mxu0
    %1671 = vdwg.mxu0
    %1672 = vmatpush.bf16.msra.mxu0 %v1310
    %1673 = vmatpush.bf16.msra.mxu0 %v1306
    %1674 = vmatpush.bf16.msra.mxu0 %v1302
    %1675 = vmatpush.bf16.msra.mxu0 %v1298
    %1676 = vmatpush.bf16.msra.mxu0 %v1294
    %1677 = vmatpush.bf16.msra.mxu0 %v1290
    %1678 = vmatpush.bf16.msra.mxu0 %v1286
    %1679 = vmatpush.bf16.msra.mxu0 %v1282
    %1680 = vmatmul.bf16.gmra.mxu0 %v722
    %v1681 = vpop.f32.mrf.mxu0
    %v1682 = vadd.f32 %v1669, %v1681
    %v1683 = vpop.f32.mrf.mxu0
    %1684 = vdwg.mxu0
    %1685 = vmatpush.bf16.msra.mxu0 %v1342
    %1686 = vmatpush.bf16.msra.mxu0 %v1338
    %1687 = vmatpush.bf16.msra.mxu0 %v1334
    %1688 = vmatpush.bf16.msra.mxu0 %v1330
    %1689 = vmatpush.bf16.msra.mxu0 %v1326
    %1690 = vmatpush.bf16.msra.mxu0 %v1322
    %1691 = vmatpush.bf16.msra.mxu0 %v1318
    %1692 = vmatpush.bf16.msra.mxu0 %v1314
    %1693 = vmatmul.bf16.gmra.mxu0 %v723
    %v1694 = vpop.f32.mrf.mxu0
    %v1695 = vadd.f32 %v1682, %v1694
    %v1696 = vpop.f32.mrf.mxu0
    %1697 = vdwg.mxu0
    %1698 = vmatpush.bf16.msra.mxu0 %v1374
    %1699 = vmatpush.bf16.msra.mxu0 %v1370
    %1700 = vmatpush.bf16.msra.mxu0 %v1366
    %1701 = vmatpush.bf16.msra.mxu0 %v1362
    %1702 = vmatpush.bf16.msra.mxu0 %v1358
    %1703 = vmatpush.bf16.msra.mxu0 %v1354
    %1704 = vmatpush.bf16.msra.mxu0 %v1350
    %1705 = vmatpush.bf16.msra.mxu0 %v1346
    %1706 = vmatmul.bf16.gmra.mxu0 %v724
    %v1707 = vpop.f32.mrf.mxu0
    %v1708 = vadd.f32 %v1695, %v1707
    %v1709 = vpop.f32.mrf.mxu0
    %1710 = vdwg.mxu0
    %v1711 = vmax.f32 %v1552, 0.0
    %v1712 = vmax.f32 %v1604, 0.0
    %v1713 = vmax.f32 %v1656, 0.0
    %v1714 = vmax.f32 %v1708, 0.0
    %v1715 = vpack.c.bf16 %v1711, %v1711
    %v1716 = vpack.c.bf16 %v1712, %v1712
    %v1717 = vpack.c.bf16 %v1713, %v1713
    %v1718 = vpack.c.bf16 %v1714, %v1714
    %v1719 = vld [vmem:[#allocation6] sm:$0xff]
    %v1720 = vld [vmem:[#allocation6 + $0x8] sm:$0xff]
    %v1721 = vld [vmem:[#allocation6 + $0x10] sm:$0xff]
    %v1722 = vld [vmem:[#allocation6 + $0x18] sm:$0xff]
    %v1723 = vld [vmem:[#allocation6 + $0x20] sm:$0xff]
    %v1724 = vld [vmem:[#allocation6 + $0x28] sm:$0xff]
    %v1725 = vld [vmem:[#allocation6 + $0x30] sm:$0xff]
    %v1726 = vld [vmem:[#allocation6 + $0x38] sm:$0xff]
    %v1727 = vld [vmem:[#allocation6 + $0x40] sm:$0xff]
    %v1728 = vld [vmem:[#allocation6 + $0x48] sm:$0xff]
    %v1729 = vld [vmem:[#allocation6 + $0x50] sm:$0xff]
    %v1730 = vld [vmem:[#allocation6 + $0x58] sm:$0xff]
    %v1731 = vld [vmem:[#allocation6 + $0x60] sm:$0xff]
    %v1732 = vld [vmem:[#allocation6 + $0x68] sm:$0xff]
    %v1733 = vld [vmem:[#allocation6 + $0x70] sm:$0xff]
    %v1734 = vld [vmem:[#allocation6 + $0x78] sm:$0xff]
    %v1735 = vld [vmem:[#allocation6 + $0x80] sm:$0xff]
    %v1736 = vld [vmem:[#allocation6 + $0x88] sm:$0xff]
    %v1737 = vld [vmem:[#allocation6 + $0x90] sm:$0xff]
    %v1738 = vld [vmem:[#allocation6 + $0x98] sm:$0xff]
    %v1739 = vld [vmem:[#allocation6 + $0xa0] sm:$0xff]
    %v1740 = vld [vmem:[#allocation6 + $0xa8] sm:$0xff]
    %v1741 = vld [vmem:[#allocation6 + $0xb0] sm:$0xff]
    %v1742 = vld [vmem:[#allocation6 + $0xb8] sm:$0xff]
    %v1743 = vld [vmem:[#allocation6 + $0xc0] sm:$0xff]
    %v1744 = vld [vmem:[#allocation6 + $0xc8] sm:$0xff]
    %v1745 = vld [vmem:[#allocation6 + $0xd0] sm:$0xff]
    %v1746 = vld [vmem:[#allocation6 + $0xd8] sm:$0xff]
    %v1747 = vld [vmem:[#allocation6 + $0xe0] sm:$0xff]
    %v1748 = vld [vmem:[#allocation6 + $0xe8] sm:$0xff]
    %v1749 = vld [vmem:[#allocation6 + $0xf0] sm:$0xff]
    %v1750 = vld [vmem:[#allocation6 + $0xf8] sm:$0xff]
    %v1751 = vld [vmem:[#allocation6 + $0x100] sm:$0xff]
    %v1752 = vld [vmem:[#allocation6 + $0x108] sm:$0xff]
    %v1753 = vld [vmem:[#allocation6 + $0x110] sm:$0xff]
    %v1754 = vld [vmem:[#allocation6 + $0x118] sm:$0xff]
    %v1755 = vld [vmem:[#allocation6 + $0x120] sm:$0xff]
    %v1756 = vld [vmem:[#allocation6 + $0x128] sm:$0xff]
    %v1757 = vld [vmem:[#allocation6 + $0x130] sm:$0xff]
    %v1758 = vld [vmem:[#allocation6 + $0x138] sm:$0xff]
    %v1759 = vld [vmem:[#allocation6 + $0x140] sm:$0xff]
    %v1760 = vld [vmem:[#allocation6 + $0x148] sm:$0xff]
    %v1761 = vld [vmem:[#allocation6 + $0x150] sm:$0xff]
    %v1762 = vld [vmem:[#allocation6 + $0x158] sm:$0xff]
    %v1763 = vld [vmem:[#allocation6 + $0x160] sm:$0xff]
    %v1764 = vld [vmem:[#allocation6 + $0x168] sm:$0xff]
    %v1765 = vld [vmem:[#allocation6 + $0x170] sm:$0xff]
    %v1766 = vld [vmem:[#allocation6 + $0x178] sm:$0xff]
    %v1767 = vld [vmem:[#allocation6 + $0x180] sm:$0xff]
    %v1768 = vld [vmem:[#allocation6 + $0x188] sm:$0xff]
    %v1769 = vld [vmem:[#allocation6 + $0x190] sm:$0xff]
    %v1770 = vld [vmem:[#allocation6 + $0x198] sm:$0xff]
    %v1771 = vld [vmem:[#allocation6 + $0x1a0] sm:$0xff]
    %v1772 = vld [vmem:[#allocation6 + $0x1a8] sm:$0xff]
    %v1773 = vld [vmem:[#allocation6 + $0x1b0] sm:$0xff]
    %v1774 = vld [vmem:[#allocation6 + $0x1b8] sm:$0xff]
    %v1775 = vld [vmem:[#allocation6 + $0x1c0] sm:$0xff]
    %v1776 = vld [vmem:[#allocation6 + $0x1c8] sm:$0xff]
    %v1777 = vld [vmem:[#allocation6 + $0x1d0] sm:$0xff]
    %v1778 = vld [vmem:[#allocation6 + $0x1d8] sm:$0xff]
    %v1779 = vld [vmem:[#allocation6 + $0x1e0] sm:$0xff]
    %v1780 = vld [vmem:[#allocation6 + $0x1e8] sm:$0xff]
    %v1781 = vld [vmem:[#allocation6 + $0x1f0] sm:$0xff]
    %v1782 = vld [vmem:[#allocation6 + $0x1f8] sm:$0xff]
    %v1783 = vld [vmem:[#allocation6 + $0x200] sm:$0xff]
    %v1784 = vld [vmem:[#allocation6 + $0x208] sm:$0xff]
    %v1785 = vld [vmem:[#allocation6 + $0x210] sm:$0xff]
    %v1786 = vld [vmem:[#allocation6 + $0x218] sm:$0xff]
    %v1787 = vld [vmem:[#allocation6 + $0x220] sm:$0xff]
    %v1788 = vld [vmem:[#allocation6 + $0x228] sm:$0xff]
    %v1789 = vld [vmem:[#allocation6 + $0x230] sm:$0xff]
    %v1790 = vld [vmem:[#allocation6 + $0x238] sm:$0xff]
    %v1791 = vld [vmem:[#allocation6 + $0x240] sm:$0xff]
    %v1792 = vld [vmem:[#allocation6 + $0x248] sm:$0xff]
    %v1793 = vld [vmem:[#allocation6 + $0x250] sm:$0xff]
    %v1794 = vld [vmem:[#allocation6 + $0x258] sm:$0xff]
    %v1795 = vld [vmem:[#allocation6 + $0x260] sm:$0xff]
    %v1796 = vld [vmem:[#allocation6 + $0x268] sm:$0xff]
    %v1797 = vld [vmem:[#allocation6 + $0x270] sm:$0xff]
    %v1798 = vld [vmem:[#allocation6 + $0x278] sm:$0xff]
    %v1799 = vld [vmem:[#allocation6 + $0x280] sm:$0xff]
    %v1800 = vld [vmem:[#allocation6 + $0x288] sm:$0xff]
    %v1801 = vld [vmem:[#allocation6 + $0x290] sm:$0xff]
    %v1802 = vld [vmem:[#allocation6 + $0x298] sm:$0xff]
    %v1803 = vld [vmem:[#allocation6 + $0x2a0] sm:$0xff]
    %v1804 = vld [vmem:[#allocation6 + $0x2a8] sm:$0xff]
    %v1805 = vld [vmem:[#allocation6 + $0x2b0] sm:$0xff]
    %v1806 = vld [vmem:[#allocation6 + $0x2b8] sm:$0xff]
    %v1807 = vld [vmem:[#allocation6 + $0x2c0] sm:$0xff]
    %v1808 = vld [vmem:[#allocation6 + $0x2c8] sm:$0xff]
    %v1809 = vld [vmem:[#allocation6 + $0x2d0] sm:$0xff]
    %v1810 = vld [vmem:[#allocation6 + $0x2d8] sm:$0xff]
    %v1811 = vld [vmem:[#allocation6 + $0x2e0] sm:$0xff]
    %v1812 = vld [vmem:[#allocation6 + $0x2e8] sm:$0xff]
    %v1813 = vld [vmem:[#allocation6 + $0x2f0] sm:$0xff]
    %v1814 = vld [vmem:[#allocation6 + $0x2f8] sm:$0xff]
    %v1815 = vld [vmem:[#allocation6 + $0x300] sm:$0xff]
    %v1816 = vld [vmem:[#allocation6 + $0x308] sm:$0xff]
    %v1817 = vld [vmem:[#allocation6 + $0x310] sm:$0xff]
    %v1818 = vld [vmem:[#allocation6 + $0x318] sm:$0xff]
    %v1819 = vld [vmem:[#allocation6 + $0x320] sm:$0xff]
    %v1820 = vld [vmem:[#allocation6 + $0x328] sm:$0xff]
    %v1821 = vld [vmem:[#allocation6 + $0x330] sm:$0xff]
    %v1822 = vld [vmem:[#allocation6 + $0x338] sm:$0xff]
    %v1823 = vld [vmem:[#allocation6 + $0x340] sm:$0xff]
    %v1824 = vld [vmem:[#allocation6 + $0x348] sm:$0xff]
    %v1825 = vld [vmem:[#allocation6 + $0x350] sm:$0xff]
    %v1826 = vld [vmem:[#allocation6 + $0x358] sm:$0xff]
    %v1827 = vld [vmem:[#allocation6 + $0x360] sm:$0xff]
    %v1828 = vld [vmem:[#allocation6 + $0x368] sm:$0xff]
    %v1829 = vld [vmem:[#allocation6 + $0x370] sm:$0xff]
    %v1830 = vld [vmem:[#allocation6 + $0x378] sm:$0xff]
    %v1831 = vld [vmem:[#allocation6 + $0x380] sm:$0xff]
    %v1832 = vld [vmem:[#allocation6 + $0x388] sm:$0xff]
    %v1833 = vld [vmem:[#allocation6 + $0x390] sm:$0xff]
    %v1834 = vld [vmem:[#allocation6 + $0x398] sm:$0xff]
    %v1835 = vld [vmem:[#allocation6 + $0x3a0] sm:$0xff]
    %v1836 = vld [vmem:[#allocation6 + $0x3a8] sm:$0xff]
    %v1837 = vld [vmem:[#allocation6 + $0x3b0] sm:$0xff]
    %v1838 = vld [vmem:[#allocation6 + $0x3b8] sm:$0xff]
    %v1839 = vld [vmem:[#allocation6 + $0x3c0] sm:$0xff]
    %v1840 = vld [vmem:[#allocation6 + $0x3c8] sm:$0xff]
    %v1841 = vld [vmem:[#allocation6 + $0x3d0] sm:$0xff]
    %v1842 = vld [vmem:[#allocation6 + $0x3d8] sm:$0xff]
    %v1843 = vld [vmem:[#allocation6 + $0x3e0] sm:$0xff]
    %v1844 = vld [vmem:[#allocation6 + $0x3e8] sm:$0xff]
    %v1845 = vld [vmem:[#allocation6 + $0x3f0] sm:$0xff]
    %v1846 = vld [vmem:[#allocation6 + $0x3f8] sm:$0xff]
    %v1847 = vld [vmem:[%s4 + $0xa] sm:$0xf]
    %v1849 = vperm.slane %v1847, 0
    %v1850 = vperm.slane %v1847, 1
    %v1851 = vperm.slane %v1847, 2
    %v1852 = vperm.slane %v1847, 3
    %v1985 = vunpack.c.l.b16 %v1719
    %v1986 = vunpack.c.h.b16 %v1719
    %v1987 = vunpack.c.l.b16 %v1720
    %v1988 = vunpack.c.h.b16 %v1720
    %v1989 = vunpack.c.l.b16 %v1721
    %v1990 = vunpack.c.h.b16 %v1721
    %v1991 = vunpack.c.l.b16 %v1722
    %v1992 = vunpack.c.h.b16 %v1722
    %v1993 = vunpack.c.l.b16 %v1723
    %v1994 = vunpack.c.h.b16 %v1723
    %v1995 = vunpack.c.l.b16 %v1724
    %v1996 = vunpack.c.h.b16 %v1724
    %v1997 = vunpack.c.l.b16 %v1725
    %v1998 = vunpack.c.h.b16 %v1725
    %v1999 = vunpack.c.l.b16 %v1726
    %v2000 = vunpack.c.h.b16 %v1726
    %v2001 = vunpack.c.l.b16 %v1727
    %v2002 = vunpack.c.h.b16 %v1727
    %v2003 = vunpack.c.l.b16 %v1728
    %v2004 = vunpack.c.h.b16 %v1728
    %v2005 = vunpack.c.l.b16 %v1729
    %v2006 = vunpack.c.h.b16 %v1729
    %v2007 = vunpack.c.l.b16 %v1730
    %v2008 = vunpack.c.h.b16 %v1730
    %v2009 = vunpack.c.l.b16 %v1731
    %v2010 = vunpack.c.h.b16 %v1731
    %v2011 = vunpack.c.l.b16 %v1732
    %v2012 = vunpack.c.h.b16 %v1732
    %v2013 = vunpack.c.l.b16 %v1733
    %v2014 = vunpack.c.h.b16 %v1733
    %v2015 = vunpack.c.l.b16 %v1734
    %v2016 = vunpack.c.h.b16 %v1734
    %v2017 = vunpack.c.l.b16 %v1735
    %v2018 = vunpack.c.h.b16 %v1735
    %v2019 = vunpack.c.l.b16 %v1736
    %v2020 = vunpack.c.h.b16 %v1736
    %v2021 = vunpack.c.l.b16 %v1737
    %v2022 = vunpack.c.h.b16 %v1737
    %v2023 = vunpack.c.l.b16 %v1738
    %v2024 = vunpack.c.h.b16 %v1738
    %v2025 = vunpack.c.l.b16 %v1739
    %v2026 = vunpack.c.h.b16 %v1739
    %v2027 = vunpack.c.l.b16 %v1740
    %v2028 = vunpack.c.h.b16 %v1740
    %v2029 = vunpack.c.l.b16 %v1741
    %v2030 = vunpack.c.h.b16 %v1741
    %v2031 = vunpack.c.l.b16 %v1742
    %v2032 = vunpack.c.h.b16 %v1742
    %v2033 = vunpack.c.l.b16 %v1743
    %v2034 = vunpack.c.h.b16 %v1743
    %v2035 = vunpack.c.l.b16 %v1744
    %v2036 = vunpack.c.h.b16 %v1744
    %v2037 = vunpack.c.l.b16 %v1745
    %v2038 = vunpack.c.h.b16 %v1745
    %v2039 = vunpack.c.l.b16 %v1746
    %v2040 = vunpack.c.h.b16 %v1746
    %v2041 = vunpack.c.l.b16 %v1747
    %v2042 = vunpack.c.h.b16 %v1747
    %v2043 = vunpack.c.l.b16 %v1748
    %v2044 = vunpack.c.h.b16 %v1748
    %v2045 = vunpack.c.l.b16 %v1749
    %v2046 = vunpack.c.h.b16 %v1749
    %v2047 = vunpack.c.l.b16 %v1750
    %v2048 = vunpack.c.h.b16 %v1750
    %v2049 = vunpack.c.l.b16 %v1751
    %v2050 = vunpack.c.h.b16 %v1751
    %v2051 = vunpack.c.l.b16 %v1752
    %v2052 = vunpack.c.h.b16 %v1752
    %v2053 = vunpack.c.l.b16 %v1753
    %v2054 = vunpack.c.h.b16 %v1753
    %v2055 = vunpack.c.l.b16 %v1754
    %v2056 = vunpack.c.h.b16 %v1754
    %v2057 = vunpack.c.l.b16 %v1755
    %v2058 = vunpack.c.h.b16 %v1755
    %v2059 = vunpack.c.l.b16 %v1756
    %v2060 = vunpack.c.h.b16 %v1756
    %v2061 = vunpack.c.l.b16 %v1757
    %v2062 = vunpack.c.h.b16 %v1757
    %v2063 = vunpack.c.l.b16 %v1758
    %v2064 = vunpack.c.h.b16 %v1758
    %v2065 = vunpack.c.l.b16 %v1759
    %v2066 = vunpack.c.h.b16 %v1759
    %v2067 = vunpack.c.l.b16 %v1760
    %v2068 = vunpack.c.h.b16 %v1760
    %v2069 = vunpack.c.l.b16 %v1761
    %v2070 = vunpack.c.h.b16 %v1761
    %v2071 = vunpack.c.l.b16 %v1762
    %v2072 = vunpack.c.h.b16 %v1762
    %v2073 = vunpack.c.l.b16 %v1763
    %v2074 = vunpack.c.h.b16 %v1763
    %v2075 = vunpack.c.l.b16 %v1764
    %v2076 = vunpack.c.h.b16 %v1764
    %v2077 = vunpack.c.l.b16 %v1765
    %v2078 = vunpack.c.h.b16 %v1765
    %v2079 = vunpack.c.l.b16 %v1766
    %v2080 = vunpack.c.h.b16 %v1766
    %v2081 = vunpack.c.l.b16 %v1767
    %v2082 = vunpack.c.h.b16 %v1767
    %v2083 = vunpack.c.l.b16 %v1768
    %v2084 = vunpack.c.h.b16 %v1768
    %v2085 = vunpack.c.l.b16 %v1769
    %v2086 = vunpack.c.h.b16 %v1769
    %v2087 = vunpack.c.l.b16 %v1770
    %v2088 = vunpack.c.h.b16 %v1770
    %v2089 = vunpack.c.l.b16 %v1771
    %v2090 = vunpack.c.h.b16 %v1771
    %v2091 = vunpack.c.l.b16 %v1772
    %v2092 = vunpack.c.h.b16 %v1772
    %v2093 = vunpack.c.l.b16 %v1773
    %v2094 = vunpack.c.h.b16 %v1773
    %v2095 = vunpack.c.l.b16 %v1774
    %v2096 = vunpack.c.h.b16 %v1774
    %v2097 = vunpack.c.l.b16 %v1775
    %v2098 = vunpack.c.h.b16 %v1775
    %v2099 = vunpack.c.l.b16 %v1776
    %v2100 = vunpack.c.h.b16 %v1776
    %v2101 = vunpack.c.l.b16 %v1777
    %v2102 = vunpack.c.h.b16 %v1777
    %v2103 = vunpack.c.l.b16 %v1778
    %v2104 = vunpack.c.h.b16 %v1778
    %v2105 = vunpack.c.l.b16 %v1779
    %v2106 = vunpack.c.h.b16 %v1779
    %v2107 = vunpack.c.l.b16 %v1780
    %v2108 = vunpack.c.h.b16 %v1780
    %v2109 = vunpack.c.l.b16 %v1781
    %v2110 = vunpack.c.h.b16 %v1781
    %v2111 = vunpack.c.l.b16 %v1782
    %v2112 = vunpack.c.h.b16 %v1782
    %v2113 = vunpack.c.l.b16 %v1783
    %v2114 = vunpack.c.h.b16 %v1783
    %v2115 = vunpack.c.l.b16 %v1784
    %v2116 = vunpack.c.h.b16 %v1784
    %v2117 = vunpack.c.l.b16 %v1785
    %v2118 = vunpack.c.h.b16 %v1785
    %v2119 = vunpack.c.l.b16 %v1786
    %v2120 = vunpack.c.h.b16 %v1786
    %v2121 = vunpack.c.l.b16 %v1787
    %v2122 = vunpack.c.h.b16 %v1787
    %v2123 = vunpack.c.l.b16 %v1788
    %v2124 = vunpack.c.h.b16 %v1788
    %v2125 = vunpack.c.l.b16 %v1789
    %v2126 = vunpack.c.h.b16 %v1789
    %v2127 = vunpack.c.l.b16 %v1790
    %v2128 = vunpack.c.h.b16 %v1790
    %v2129 = vunpack.c.l.b16 %v1791
    %v2130 = vunpack.c.h.b16 %v1791
    %v2131 = vunpack.c.l.b16 %v1792
    %v2132 = vunpack.c.h.b16 %v1792
    %v2133 = vunpack.c.l.b16 %v1793
    %v2134 = vunpack.c.h.b16 %v1793
    %v2135 = vunpack.c.l.b16 %v1794
    %v2136 = vunpack.c.h.b16 %v1794
    %v2137 = vunpack.c.l.b16 %v1795
    %v2138 = vunpack.c.h.b16 %v1795
    %v2139 = vunpack.c.l.b16 %v1796
    %v2140 = vunpack.c.h.b16 %v1796
    %v2141 = vunpack.c.l.b16 %v1797
    %v2142 = vunpack.c.h.b16 %v1797
    %v2143 = vunpack.c.l.b16 %v1798
    %v2144 = vunpack.c.h.b16 %v1798
    %v2145 = vunpack.c.l.b16 %v1799
    %v2146 = vunpack.c.h.b16 %v1799
    %v2147 = vunpack.c.l.b16 %v1800
    %v2148 = vunpack.c.h.b16 %v1800
    %v2149 = vunpack.c.l.b16 %v1801
    %v2150 = vunpack.c.h.b16 %v1801
    %v2151 = vunpack.c.l.b16 %v1802
    %v2152 = vunpack.c.h.b16 %v1802
    %v2153 = vunpack.c.l.b16 %v1803
    %v2154 = vunpack.c.h.b16 %v1803
    %v2155 = vunpack.c.l.b16 %v1804
    %v2156 = vunpack.c.h.b16 %v1804
    %v2157 = vunpack.c.l.b16 %v1805
    %v2158 = vunpack.c.h.b16 %v1805
    %v2159 = vunpack.c.l.b16 %v1806
    %v2160 = vunpack.c.h.b16 %v1806
    %v2161 = vunpack.c.l.b16 %v1807
    %v2162 = vunpack.c.h.b16 %v1807
    %v2163 = vunpack.c.l.b16 %v1808
    %v2164 = vunpack.c.h.b16 %v1808
    %v2165 = vunpack.c.l.b16 %v1809
    %v2166 = vunpack.c.h.b16 %v1809
    %v2167 = vunpack.c.l.b16 %v1810
    %v2168 = vunpack.c.h.b16 %v1810
    %v2169 = vunpack.c.l.b16 %v1811
    %v2170 = vunpack.c.h.b16 %v1811
    %v2171 = vunpack.c.l.b16 %v1812
    %v2172 = vunpack.c.h.b16 %v1812
    %v2173 = vunpack.c.l.b16 %v1813
    %v2174 = vunpack.c.h.b16 %v1813
    %v2175 = vunpack.c.l.b16 %v1814
    %v2176 = vunpack.c.h.b16 %v1814
    %v2177 = vunpack.c.l.b16 %v1815
    %v2178 = vunpack.c.h.b16 %v1815
    %v2179 = vunpack.c.l.b16 %v1816
    %v2180 = vunpack.c.h.b16 %v1816
    %v2181 = vunpack.c.l.b16 %v1817
    %v2182 = vunpack.c.h.b16 %v1817
    %v2183 = vunpack.c.l.b16 %v1818
    %v2184 = vunpack.c.h.b16 %v1818
    %v2185 = vunpack.c.l.b16 %v1819
    %v2186 = vunpack.c.h.b16 %v1819
    %v2187 = vunpack.c.l.b16 %v1820
    %v2188 = vunpack.c.h.b16 %v1820
    %v2189 = vunpack.c.l.b16 %v1821
    %v2190 = vunpack.c.h.b16 %v1821
    %v2191 = vunpack.c.l.b16 %v1822
    %v2192 = vunpack.c.h.b16 %v1822
    %v2193 = vunpack.c.l.b16 %v1823
    %v2194 = vunpack.c.h.b16 %v1823
    %v2195 = vunpack.c.l.b16 %v1824
    %v2196 = vunpack.c.h.b16 %v1824
    %v2197 = vunpack.c.l.b16 %v1825
    %v2198 = vunpack.c.h.b16 %v1825
    %v2199 = vunpack.c.l.b16 %v1826
    %v2200 = vunpack.c.h.b16 %v1826
    %v2201 = vunpack.c.l.b16 %v1827
    %v2202 = vunpack.c.h.b16 %v1827
    %v2203 = vunpack.c.l.b16 %v1828
    %v2204 = vunpack.c.h.b16 %v1828
    %v2205 = vunpack.c.l.b16 %v1829
    %v2206 = vunpack.c.h.b16 %v1829
    %v2207 = vunpack.c.l.b16 %v1830
    %v2208 = vunpack.c.h.b16 %v1830
    %v2209 = vunpack.c.l.b16 %v1831
    %v2210 = vunpack.c.h.b16 %v1831
    %v2211 = vunpack.c.l.b16 %v1832
    %v2212 = vunpack.c.h.b16 %v1832
    %v2213 = vunpack.c.l.b16 %v1833
    %v2214 = vunpack.c.h.b16 %v1833
    %v2215 = vunpack.c.l.b16 %v1834
    %v2216 = vunpack.c.h.b16 %v1834
    %v2217 = vunpack.c.l.b16 %v1835
    %v2218 = vunpack.c.h.b16 %v1835
    %v2219 = vunpack.c.l.b16 %v1836
    %v2220 = vunpack.c.h.b16 %v1836
    %v2221 = vunpack.c.l.b16 %v1837
    %v2222 = vunpack.c.h.b16 %v1837
    %v2223 = vunpack.c.l.b16 %v1838
    %v2224 = vunpack.c.h.b16 %v1838
    %v2225 = vunpack.c.l.b16 %v1839
    %v2226 = vunpack.c.h.b16 %v1839
    %v2227 = vunpack.c.l.b16 %v1840
    %v2228 = vunpack.c.h.b16 %v1840
    %v2229 = vunpack.c.l.b16 %v1841
    %v2230 = vunpack.c.h.b16 %v1841
    %v2231 = vunpack.c.l.b16 %v1842
    %v2232 = vunpack.c.h.b16 %v1842
    %v2233 = vunpack.c.l.b16 %v1843
    %v2234 = vunpack.c.h.b16 %v1843
    %v2235 = vunpack.c.l.b16 %v1844
    %v2236 = vunpack.c.h.b16 %v1844
    %v2237 = vunpack.c.l.b16 %v1845
    %v2238 = vunpack.c.h.b16 %v1845
    %v2239 = vunpack.c.l.b16 %v1846
    %v2240 = vunpack.c.h.b16 %v1846
    %v2241 = vpack.c.b16 %v1989, %v1985
    %v2242 = vpack.c.b16 %v1990, %v1986
    %v2243 = vpack.c.b16 %v1991, %v1987
    %v2244 = vpack.c.b16 %v1992, %v1988
    %v2245 = vpack.c.b16 %v1997, %v1993
    %v2246 = vpack.c.b16 %v1998, %v1994
    %v2247 = vpack.c.b16 %v1999, %v1995
    %v2248 = vpack.c.b16 %v2000, %v1996
    %v2249 = vpack.c.b16 %v2005, %v2001
    %v2250 = vpack.c.b16 %v2006, %v2002
    %v2251 = vpack.c.b16 %v2007, %v2003
    %v2252 = vpack.c.b16 %v2008, %v2004
    %v2253 = vpack.c.b16 %v2013, %v2009
    %v2254 = vpack.c.b16 %v2014, %v2010
    %v2255 = vpack.c.b16 %v2015, %v2011
    %v2256 = vpack.c.b16 %v2016, %v2012
    %v2257 = vpack.c.b16 %v2021, %v2017
    %v2258 = vpack.c.b16 %v2022, %v2018
    %v2259 = vpack.c.b16 %v2023, %v2019
    %v2260 = vpack.c.b16 %v2024, %v2020
    %v2261 = vpack.c.b16 %v2029, %v2025
    %v2262 = vpack.c.b16 %v2030, %v2026
    %v2263 = vpack.c.b16 %v2031, %v2027
    %v2264 = vpack.c.b16 %v2032, %v2028
    %v2265 = vpack.c.b16 %v2037, %v2033
    %v2266 = vpack.c.b16 %v2038, %v2034
    %v2267 = vpack.c.b16 %v2039, %v2035
    %v2268 = vpack.c.b16 %v2040, %v2036
    %v2269 = vpack.c.b16 %v2045, %v2041
    %v2270 = vpack.c.b16 %v2046, %v2042
    %v2271 = vpack.c.b16 %v2047, %v2043
    %v2272 = vpack.c.b16 %v2048, %v2044
    %v2273 = vpack.c.b16 %v2053, %v2049
    %v2274 = vpack.c.b16 %v2054, %v2050
    %v2275 = vpack.c.b16 %v2055, %v2051
    %v2276 = vpack.c.b16 %v2056, %v2052
    %v2277 = vpack.c.b16 %v2061, %v2057
    %v2278 = vpack.c.b16 %v2062, %v2058
    %v2279 = vpack.c.b16 %v2063, %v2059
    %v2280 = vpack.c.b16 %v2064, %v2060
    %v2281 = vpack.c.b16 %v2069, %v2065
    %v2282 = vpack.c.b16 %v2070, %v2066
    %v2283 = vpack.c.b16 %v2071, %v2067
    %v2284 = vpack.c.b16 %v2072, %v2068
    %v2285 = vpack.c.b16 %v2077, %v2073
    %v2286 = vpack.c.b16 %v2078, %v2074
    %v2287 = vpack.c.b16 %v2079, %v2075
    %v2288 = vpack.c.b16 %v2080, %v2076
    %v2289 = vpack.c.b16 %v2085, %v2081
    %v2290 = vpack.c.b16 %v2086, %v2082
    %v2291 = vpack.c.b16 %v2087, %v2083
    %v2292 = vpack.c.b16 %v2088, %v2084
    %v2293 = vpack.c.b16 %v2093, %v2089
    %v2294 = vpack.c.b16 %v2094, %v2090
    %v2295 = vpack.c.b16 %v2095, %v2091
    %v2296 = vpack.c.b16 %v2096, %v2092
    %v2297 = vpack.c.b16 %v2101, %v2097
    %v2298 = vpack.c.b16 %v2102, %v2098
    %v2299 = vpack.c.b16 %v2103, %v2099
    %v2300 = vpack.c.b16 %v2104, %v2100
    %v2301 = vpack.c.b16 %v2109, %v2105
    %v2302 = vpack.c.b16 %v2110, %v2106
    %v2303 = vpack.c.b16 %v2111, %v2107
    %v2304 = vpack.c.b16 %v2112, %v2108
    %v2305 = vpack.c.b16 %v2117, %v2113
    %v2306 = vpack.c.b16 %v2118, %v2114
    %v2307 = vpack.c.b16 %v2119, %v2115
    %v2308 = vpack.c.b16 %v2120, %v2116
    %v2309 = vpack.c.b16 %v2125, %v2121
    %v2310 = vpack.c.b16 %v2126, %v2122
    %v2311 = vpack.c.b16 %v2127, %v2123
    %v2312 = vpack.c.b16 %v2128, %v2124
    %v2313 = vpack.c.b16 %v2133, %v2129
    %v2314 = vpack.c.b16 %v2134, %v2130
    %v2315 = vpack.c.b16 %v2135, %v2131
    %v2316 = vpack.c.b16 %v2136, %v2132
    %v2317 = vpack.c.b16 %v2141, %v2137
    %v2318 = vpack.c.b16 %v2142, %v2138
    %v2319 = vpack.c.b16 %v2143, %v2139
    %v2320 = vpack.c.b16 %v2144, %v2140
    %v2321 = vpack.c.b16 %v2149, %v2145
    %v2322 = vpack.c.b16 %v2150, %v2146
    %v2323 = vpack.c.b16 %v2151, %v2147
    %v2324 = vpack.c.b16 %v2152, %v2148
    %v2325 = vpack.c.b16 %v2157, %v2153
    %v2326 = vpack.c.b16 %v2158, %v2154
    %v2327 = vpack.c.b16 %v2159, %v2155
    %v2328 = vpack.c.b16 %v2160, %v2156
    %v2329 = vpack.c.b16 %v2165, %v2161
    %v2330 = vpack.c.b16 %v2166, %v2162
    %v2331 = vpack.c.b16 %v2167, %v2163
    %v2332 = vpack.c.b16 %v2168, %v2164
    %v2333 = vpack.c.b16 %v2173, %v2169
    %v2334 = vpack.c.b16 %v2174, %v2170
    %v2335 = vpack.c.b16 %v2175, %v2171
    %v2336 = vpack.c.b16 %v2176, %v2172
    %v2337 = vpack.c.b16 %v2181, %v2177
    %v2338 = vpack.c.b16 %v2182, %v2178
    %v2339 = vpack.c.b16 %v2183, %v2179
    %v2340 = vpack.c.b16 %v2184, %v2180
    %v2341 = vpack.c.b16 %v2189, %v2185
    %v2342 = vpack.c.b16 %v2190, %v2186
    %v2343 = vpack.c.b16 %v2191, %v2187
    %v2344 = vpack.c.b16 %v2192, %v2188
    %v2345 = vpack.c.b16 %v2197, %v2193
    %v2346 = vpack.c.b16 %v2198, %v2194
    %v2347 = vpack.c.b16 %v2199, %v2195
    %v2348 = vpack.c.b16 %v2200, %v2196
    %v2349 = vpack.c.b16 %v2205, %v2201
    %v2350 = vpack.c.b16 %v2206, %v2202
    %v2351 = vpack.c.b16 %v2207, %v2203
    %v2352 = vpack.c.b16 %v2208, %v2204
    %v2353 = vpack.c.b16 %v2213, %v2209
    %v2354 = vpack.c.b16 %v2214, %v2210
    %v2355 = vpack.c.b16 %v2215, %v2211
    %v2356 = vpack.c.b16 %v2216, %v2212
    %v2357 = vpack.c.b16 %v2221, %v2217
    %v2358 = vpack.c.b16 %v2222, %v2218
    %v2359 = vpack.c.b16 %v2223, %v2219
    %v2360 = vpack.c.b16 %v2224, %v2220
    %v2361 = vpack.c.b16 %v2229, %v2225
    %v2362 = vpack.c.b16 %v2230, %v2226
    %v2363 = vpack.c.b16 %v2231, %v2227
    %v2364 = vpack.c.b16 %v2232, %v2228
    %v2365 = vpack.c.b16 %v2237, %v2233
    %v2366 = vpack.c.b16 %v2238, %v2234
    %v2367 = vpack.c.b16 %v2239, %v2235
    %v2368 = vpack.c.b16 %v2240, %v2236
    %2497 = vmatpush.bf16.msra.mxu0 %v2269
    %2498 = vmatpush.bf16.msra.mxu0 %v2265
    %2499 = vmatpush.bf16.msra.mxu0 %v2261
    %2500 = vmatpush.bf16.msra.mxu0 %v2257
    %2501 = vmatpush.bf16.msra.mxu0 %v2253
    %2502 = vmatpush.bf16.msra.mxu0 %v2249
    %2503 = vmatpush.bf16.msra.mxu0 %v2245
    %2504 = vmatpush.bf16.msra.mxu0 %v2241
    %2505 = vmatmul.bf16.gmra.mxu0 %v1715
    %v2506 = vpop.f32.mrf.mxu0
    %v2507 = vadd.f32 %v1849, %v2506
    %v2508 = vpop.f32.mrf.mxu0
    %2509 = vdwg.mxu0
    %2510 = vmatpush.bf16.msra.mxu0 %v2301
    %2511 = vmatpush.bf16.msra.mxu0 %v2297
    %2512 = vmatpush.bf16.msra.mxu0 %v2293
    %2513 = vmatpush.bf16.msra.mxu0 %v2289
    %2514 = vmatpush.bf16.msra.mxu0 %v2285
    %2515 = vmatpush.bf16.msra.mxu0 %v2281
    %2516 = vmatpush.bf16.msra.mxu0 %v2277
    %2517 = vmatpush.bf16.msra.mxu0 %v2273
    %2518 = vmatmul.bf16.gmra.mxu0 %v1716
    %v2519 = vpop.f32.mrf.mxu0
    %v2520 = vadd.f32 %v2507, %v2519
    %v2521 = vpop.f32.mrf.mxu0
    %2522 = vdwg.mxu0
    %2523 = vmatpush.bf16.msra.mxu0 %v2333
    %2524 = vmatpush.bf16.msra.mxu0 %v2329
    %2525 = vmatpush.bf16.msra.mxu0 %v2325
    %2526 = vmatpush.bf16.msra.mxu0 %v2321
    %2527 = vmatpush.bf16.msra.mxu0 %v2317
    %2528 = vmatpush.bf16.msra.mxu0 %v2313
    %2529 = vmatpush.bf16.msra.mxu0 %v2309
    %2530 = vmatpush.bf16.msra.mxu0 %v2305
    %2531 = vmatmul.bf16.gmra.mxu0 %v1717
    %v2532 = vpop.f32.mrf.mxu0
    %v2533 = vadd.f32 %v2520, %v2532
    %v2534 = vpop.f32.mrf.mxu0
    %2535 = vdwg.mxu0
    %2536 = vmatpush.bf16.msra.mxu0 %v2365
    %2537 = vmatpush.bf16.msra.mxu0 %v2361
    %2538 = vmatpush.bf16.msra.mxu0 %v2357
    %2539 = vmatpush.bf16.msra.mxu0 %v2353
    %2540 = vmatpush.bf16.msra.mxu0 %v2349
    %2541 = vmatpush.bf16.msra.mxu0 %v2345
    %2542 = vmatpush.bf16.msra.mxu0 %v2341
    %2543 = vmatpush.bf16.msra.mxu0 %v2337
    %2544 = vmatmul.bf16.gmra.mxu0 %v1718
    %v2545 = vpop.f32.mrf.mxu0
    %v2546 = vadd.f32 %v2533, %v2545
    %v2547 = vpop.f32.mrf.mxu0
    %2548 = vdwg.mxu0
    %2549 = vmatpush.bf16.msra.mxu0 %v2270
    %2550 = vmatpush.bf16.msra.mxu0 %v2266
    %2551 = vmatpush.bf16.msra.mxu0 %v2262
    %2552 = vmatpush.bf16.msra.mxu0 %v2258
    %2553 = vmatpush.bf16.msra.mxu0 %v2254
    %2554 = vmatpush.bf16.msra.mxu0 %v2250
    %2555 = vmatpush.bf16.msra.mxu0 %v2246
    %2556 = vmatpush.bf16.msra.mxu0 %v2242
    %2557 = vmatmul.bf16.gmra.mxu0 %v1715
    %v2558 = vpop.f32.mrf.mxu0
    %v2559 = vadd.f32 %v1850, %v2558
    %v2560 = vpop.f32.mrf.mxu0
    %2561 = vdwg.mxu0
    %2562 = vmatpush.bf16.msra.mxu0 %v2302
    %2563 = vmatpush.bf16.msra.mxu0 %v2298
    %2564 = vmatpush.bf16.msra.mxu0 %v2294
    %2565 = vmatpush.bf16.msra.mxu0 %v2290
    %2566 = vmatpush.bf16.msra.mxu0 %v2286
    %2567 = vmatpush.bf16.msra.mxu0 %v2282
    %2568 = vmatpush.bf16.msra.mxu0 %v2278
    %2569 = vmatpush.bf16.msra.mxu0 %v2274
    %2570 = vmatmul.bf16.gmra.mxu0 %v1716
    %v2571 = vpop.f32.mrf.mxu0
    %v2572 = vadd.f32 %v2559, %v2571
    %v2573 = vpop.f32.mrf.mxu0
    %2574 = vdwg.mxu0
    %2575 = vmatpush.bf16.msra.mxu0 %v2334
    %2576 = vmatpush.bf16.msra.mxu0 %v2330
    %2577 = vmatpush.bf16.msra.mxu0 %v2326
    %2578 = vmatpush.bf16.msra.mxu0 %v2322
    %2579 = vmatpush.bf16.msra.mxu0 %v2318
    %2580 = vmatpush.bf16.msra.mxu0 %v2314
    %2581 = vmatpush.bf16.msra.mxu0 %v2310
    %2582 = vmatpush.bf16.msra.mxu0 %v2306
    %2583 = vmatmul.bf16.gmra.mxu0 %v1717
    %v2584 = vpop.f32.mrf.mxu0
    %v2585 = vadd.f32 %v2572, %v2584
    %v2586 = vpop.f32.mrf.mxu0
    %2587 = vdwg.mxu0
    %2588 = vmatpush.bf16.msra.mxu0 %v2366
    %2589 = vmatpush.bf16.msra.mxu0 %v2362
    %2590 = vmatpush.bf16.msra.mxu0 %v2358
    %2591 = vmatpush.bf16.msra.mxu0 %v2354
    %2592 = vmatpush.bf16.msra.mxu0 %v2350
    %2593 = vmatpush.bf16.msra.mxu0 %v2346
    %2594 = vmatpush.bf16.msra.mxu0 %v2342
    %2595 = vmatpush.bf16.msra.mxu0 %v2338
    %2596 = vmatmul.bf16.gmra.mxu0 %v1718
    %v2597 = vpop.f32.mrf.mxu0
    %v2598 = vadd.f32 %v2585, %v2597
    %v2599 = vpop.f32.mrf.mxu0
    %2600 = vdwg.mxu0
    %2601 = vmatpush.bf16.msra.mxu0 %v2271
    %2602 = vmatpush.bf16.msra.mxu0 %v2267
    %2603 = vmatpush.bf16.msra.mxu0 %v2263
    %2604 = vmatpush.bf16.msra.mxu0 %v2259
    %2605 = vmatpush.bf16.msra.mxu0 %v2255
    %2606 = vmatpush.bf16.msra.mxu0 %v2251
    %2607 = vmatpush.bf16.msra.mxu0 %v2247
    %2608 = vmatpush.bf16.msra.mxu0 %v2243
    %2609 = vmatmul.bf16.gmra.mxu0 %v1715
    %v2610 = vpop.f32.mrf.mxu0
    %v2611 = vadd.f32 %v1851, %v2610
    %v2612 = vpop.f32.mrf.mxu0
    %2613 = vdwg.mxu0
    %2614 = vmatpush.bf16.msra.mxu0 %v2303
    %2615 = vmatpush.bf16.msra.mxu0 %v2299
    %2616 = vmatpush.bf16.msra.mxu0 %v2295
    %2617 = vmatpush.bf16.msra.mxu0 %v2291
    %2618 = vmatpush.bf16.msra.mxu0 %v2287
    %2619 = vmatpush.bf16.msra.mxu0 %v2283
    %2620 = vmatpush.bf16.msra.mxu0 %v2279
    %2621 = vmatpush.bf16.msra.mxu0 %v2275
    %2622 = vmatmul.bf16.gmra.mxu0 %v1716
    %v2623 = vpop.f32.mrf.mxu0
    %v2624 = vadd.f32 %v2611, %v2623
    %v2625 = vpop.f32.mrf.mxu0
    %2626 = vdwg.mxu0
    %2627 = vmatpush.bf16.msra.mxu0 %v2335
    %2628 = vmatpush.bf16.msra.mxu0 %v2331
    %2629 = vmatpush.bf16.msra.mxu0 %v2327
    %2630 = vmatpush.bf16.msra.mxu0 %v2323
    %2631 = vmatpush.bf16.msra.mxu0 %v2319
    %2632 = vmatpush.bf16.msra.mxu0 %v2315
    %2633 = vmatpush.bf16.msra.mxu0 %v2311
    %2634 = vmatpush.bf16.msra.mxu0 %v2307
    %2635 = vmatmul.bf16.gmra.mxu0 %v1717
    %v2636 = vpop.f32.mrf.mxu0
    %v2637 = vadd.f32 %v2624, %v2636
    %v2638 = vpop.f32.mrf.mxu0
    %2639 = vdwg.mxu0
    %2640 = vmatpush.bf16.msra.mxu0 %v2367
    %2641 = vmatpush.bf16.msra.mxu0 %v2363
    %2642 = vmatpush.bf16.msra.mxu0 %v2359
    %2643 = vmatpush.bf16.msra.mxu0 %v2355
    %2644 = vmatpush.bf16.msra.mxu0 %v2351
    %2645 = vmatpush.bf16.msra.mxu0 %v2347
    %2646 = vmatpush.bf16.msra.mxu0 %v2343
    %2647 = vmatpush.bf16.msra.mxu0 %v2339
    %2648 = vmatmul.bf16.gmra.mxu0 %v1718
    %v2649 = vpop.f32.mrf.mxu0
    %v2650 = vadd.f32 %v2637, %v2649
    %v2651 = vpop.f32.mrf.mxu0
    %2652 = vdwg.mxu0
    %2653 = vmatpush.bf16.msra.mxu0 %v2272
    %2654 = vmatpush.bf16.msra.mxu0 %v2268
    %2655 = vmatpush.bf16.msra.mxu0 %v2264
    %2656 = vmatpush.bf16.msra.mxu0 %v2260
    %2657 = vmatpush.bf16.msra.mxu0 %v2256
    %2658 = vmatpush.bf16.msra.mxu0 %v2252
    %2659 = vmatpush.bf16.msra.mxu0 %v2248
    %2660 = vmatpush.bf16.msra.mxu0 %v2244
    %2661 = vmatmul.bf16.gmra.mxu0 %v1715
    %v2662 = vpop.f32.mrf.mxu0
    %v2663 = vadd.f32 %v1852, %v2662
    %v2664 = vpop.f32.mrf.mxu0
    %2665 = vdwg.mxu0
    %2666 = vmatpush.bf16.msra.mxu0 %v2304
    %2667 = vmatpush.bf16.msra.mxu0 %v2300
    %2668 = vmatpush.bf16.msra.mxu0 %v2296
    %2669 = vmatpush.bf16.msra.mxu0 %v2292
    %2670 = vmatpush.bf16.msra.mxu0 %v2288
    %2671 = vmatpush.bf16.msra.mxu0 %v2284
    %2672 = vmatpush.bf16.msra.mxu0 %v2280
    %2673 = vmatpush.bf16.msra.mxu0 %v2276
    %2674 = vmatmul.bf16.gmra.mxu0 %v1716
    %v2675 = vpop.f32.mrf.mxu0
    %v2676 = vadd.f32 %v2663, %v2675
    %v2677 = vpop.f32.mrf.mxu0
    %2678 = vdwg.mxu0
    %2679 = vmatpush.bf16.msra.mxu0 %v2336
    %2680 = vmatpush.bf16.msra.mxu0 %v2332
    %2681 = vmatpush.bf16.msra.mxu0 %v2328
    %2682 = vmatpush.bf16.msra.mxu0 %v2324
    %2683 = vmatpush.bf16.msra.mxu0 %v2320
    %2684 = vmatpush.bf16.msra.mxu0 %v2316
    %2685 = vmatpush.bf16.msra.mxu0 %v2312
    %2686 = vmatpush.bf16.msra.mxu0 %v2308
    %2687 = vmatmul.bf16.gmra.mxu0 %v1717
    %v2688 = vpop.f32.mrf.mxu0
    %v2689 = vadd.f32 %v2676, %v2688
    %v2690 = vpop.f32.mrf.mxu0
    %2691 = vdwg.mxu0
    %2692 = vmatpush.bf16.msra.mxu0 %v2368
    %2693 = vmatpush.bf16.msra.mxu0 %v2364
    %2694 = vmatpush.bf16.msra.mxu0 %v2360
    %2695 = vmatpush.bf16.msra.mxu0 %v2356
    %2696 = vmatpush.bf16.msra.mxu0 %v2352
    %2697 = vmatpush.bf16.msra.mxu0 %v2348
    %2698 = vmatpush.bf16.msra.mxu0 %v2344
    %2699 = vmatpush.bf16.msra.mxu0 %v2340
    %2700 = vmatmul.bf16.gmra.mxu0 %v1718
    %v2701 = vpop.f32.mrf.mxu0
    %v2702 = vadd.f32 %v2689, %v2701
    %v2703 = vpop.f32.mrf.mxu0
    %2704 = vdwg.mxu0
    %v2705 = vmax.f32 %v2546, 0.0
    %v2706 = vmax.f32 %v2598, 0.0
    %v2707 = vmax.f32 %v2650, 0.0
    %v2708 = vmax.f32 %v2702, 0.0
    %v2709 = vpack.c.bf16 %v2705, %v2705
    %v2710 = vpack.c.bf16 %v2706, %v2706
    %v2711 = vpack.c.bf16 %v2707, %v2707
    %v2712 = vpack.c.bf16 %v2708, %v2708
    %v2713 = vld [vmem:[#allocation7] sm:$0xff]
    %v2714 = vld [vmem:[#allocation7 + $0x8] sm:$0xff]
    %v2715 = vld [vmem:[#allocation7 + $0x10] sm:$0xff]
    %v2716 = vld [vmem:[#allocation7 + $0x18] sm:$0xff]
    %v2717 = vld [vmem:[#allocation7 + $0x20] sm:$0xff]
    %v2718 = vld [vmem:[#allocation7 + $0x28] sm:$0xff]
    %v2719 = vld [vmem:[#allocation7 + $0x30] sm:$0xff]
    %v2720 = vld [vmem:[#allocation7 + $0x38] sm:$0xff]
    %v2721 = vld [vmem:[#allocation7 + $0x40] sm:$0xff]
    %v2722 = vld [vmem:[#allocation7 + $0x48] sm:$0xff]
    %v2723 = vld [vmem:[#allocation7 + $0x50] sm:$0xff]
    %v2724 = vld [vmem:[#allocation7 + $0x58] sm:$0xff]
    %v2725 = vld [vmem:[#allocation7 + $0x60] sm:$0xff]
    %v2726 = vld [vmem:[#allocation7 + $0x68] sm:$0xff]
    %v2727 = vld [vmem:[#allocation7 + $0x70] sm:$0xff]
    %v2728 = vld [vmem:[#allocation7 + $0x78] sm:$0xff]
    %v2729 = vld [vmem:[#allocation7 + $0x80] sm:$0xff]
    %v2730 = vld [vmem:[#allocation7 + $0x88] sm:$0xff]
    %v2731 = vld [vmem:[#allocation7 + $0x90] sm:$0xff]
    %v2732 = vld [vmem:[#allocation7 + $0x98] sm:$0xff]
    %v2733 = vld [vmem:[#allocation7 + $0xa0] sm:$0xff]
    %v2734 = vld [vmem:[#allocation7 + $0xa8] sm:$0xff]
    %v2735 = vld [vmem:[#allocation7 + $0xb0] sm:$0xff]
    %v2736 = vld [vmem:[#allocation7 + $0xb8] sm:$0xff]
    %v2737 = vld [vmem:[#allocation7 + $0xc0] sm:$0xff]
    %v2738 = vld [vmem:[#allocation7 + $0xc8] sm:$0xff]
    %v2739 = vld [vmem:[#allocation7 + $0xd0] sm:$0xff]
    %v2740 = vld [vmem:[#allocation7 + $0xd8] sm:$0xff]
    %v2741 = vld [vmem:[#allocation7 + $0xe0] sm:$0xff]
    %v2742 = vld [vmem:[#allocation7 + $0xe8] sm:$0xff]
    %v2743 = vld [vmem:[#allocation7 + $0xf0] sm:$0xff]
    %v2744 = vld [vmem:[#allocation7 + $0xf8] sm:$0xff]
    %v2745 = vld [vmem:[#allocation7 + $0x100] sm:$0xff]
    %v2746 = vld [vmem:[#allocation7 + $0x108] sm:$0xff]
    %v2747 = vld [vmem:[#allocation7 + $0x110] sm:$0xff]
    %v2748 = vld [vmem:[#allocation7 + $0x118] sm:$0xff]
    %v2749 = vld [vmem:[#allocation7 + $0x120] sm:$0xff]
    %v2750 = vld [vmem:[#allocation7 + $0x128] sm:$0xff]
    %v2751 = vld [vmem:[#allocation7 + $0x130] sm:$0xff]
    %v2752 = vld [vmem:[#allocation7 + $0x138] sm:$0xff]
    %v2753 = vld [vmem:[#allocation7 + $0x140] sm:$0xff]
    %v2754 = vld [vmem:[#allocation7 + $0x148] sm:$0xff]
    %v2755 = vld [vmem:[#allocation7 + $0x150] sm:$0xff]
    %v2756 = vld [vmem:[#allocation7 + $0x158] sm:$0xff]
    %v2757 = vld [vmem:[#allocation7 + $0x160] sm:$0xff]
    %v2758 = vld [vmem:[#allocation7 + $0x168] sm:$0xff]
    %v2759 = vld [vmem:[#allocation7 + $0x170] sm:$0xff]
    %v2760 = vld [vmem:[#allocation7 + $0x178] sm:$0xff]
    %v2761 = vld [vmem:[#allocation7 + $0x180] sm:$0xff]
    %v2762 = vld [vmem:[#allocation7 + $0x188] sm:$0xff]
    %v2763 = vld [vmem:[#allocation7 + $0x190] sm:$0xff]
    %v2764 = vld [vmem:[#allocation7 + $0x198] sm:$0xff]
    %v2765 = vld [vmem:[#allocation7 + $0x1a0] sm:$0xff]
    %v2766 = vld [vmem:[#allocation7 + $0x1a8] sm:$0xff]
    %v2767 = vld [vmem:[#allocation7 + $0x1b0] sm:$0xff]
    %v2768 = vld [vmem:[#allocation7 + $0x1b8] sm:$0xff]
    %v2769 = vld [vmem:[#allocation7 + $0x1c0] sm:$0xff]
    %v2770 = vld [vmem:[#allocation7 + $0x1c8] sm:$0xff]
    %v2771 = vld [vmem:[#allocation7 + $0x1d0] sm:$0xff]
    %v2772 = vld [vmem:[#allocation7 + $0x1d8] sm:$0xff]
    %v2773 = vld [vmem:[#allocation7 + $0x1e0] sm:$0xff]
    %v2774 = vld [vmem:[#allocation7 + $0x1e8] sm:$0xff]
    %v2775 = vld [vmem:[#allocation7 + $0x1f0] sm:$0xff]
    %v2776 = vld [vmem:[#allocation7 + $0x1f8] sm:$0xff]
    %v2777 = vld [vmem:[%s4 + $0xe] sm:$0x3]
    %v2779 = vperm.slane %v2777, 0
    %v2780 = vperm.slane %v2777, 1
    %v2847 = vunpack.c.l.b16 %v2713
    %v2848 = vunpack.c.h.b16 %v2713
    %v2849 = vunpack.c.l.b16 %v2714
    %v2850 = vunpack.c.h.b16 %v2714
    %v2851 = vunpack.c.l.b16 %v2715
    %v2852 = vunpack.c.h.b16 %v2715
    %v2853 = vunpack.c.l.b16 %v2716
    %v2854 = vunpack.c.h.b16 %v2716
    %v2855 = vunpack.c.l.b16 %v2717
    %v2856 = vunpack.c.h.b16 %v2717
    %v2857 = vunpack.c.l.b16 %v2718
    %v2858 = vunpack.c.h.b16 %v2718
    %v2859 = vunpack.c.l.b16 %v2719
    %v2860 = vunpack.c.h.b16 %v2719
    %v2861 = vunpack.c.l.b16 %v2720
    %v2862 = vunpack.c.h.b16 %v2720
    %v2863 = vunpack.c.l.b16 %v2721
    %v2864 = vunpack.c.h.b16 %v2721
    %v2865 = vunpack.c.l.b16 %v2722
    %v2866 = vunpack.c.h.b16 %v2722
    %v2867 = vunpack.c.l.b16 %v2723
    %v2868 = vunpack.c.h.b16 %v2723
    %v2869 = vunpack.c.l.b16 %v2724
    %v2870 = vunpack.c.h.b16 %v2724
    %v2871 = vunpack.c.l.b16 %v2725
    %v2872 = vunpack.c.h.b16 %v2725
    %v2873 = vunpack.c.l.b16 %v2726
    %v2874 = vunpack.c.h.b16 %v2726
    %v2875 = vunpack.c.l.b16 %v2727
    %v2876 = vunpack.c.h.b16 %v2727
    %v2877 = vunpack.c.l.b16 %v2728
    %v2878 = vunpack.c.h.b16 %v2728
    %v2879 = vunpack.c.l.b16 %v2729
    %v2880 = vunpack.c.h.b16 %v2729
    %v2881 = vunpack.c.l.b16 %v2730
    %v2882 = vunpack.c.h.b16 %v2730
    %v2883 = vunpack.c.l.b16 %v2731
    %v2884 = vunpack.c.h.b16 %v2731
    %v2885 = vunpack.c.l.b16 %v2732
    %v2886 = vunpack.c.h.b16 %v2732
    %v2887 = vunpack.c.l.b16 %v2733
    %v2888 = vunpack.c.h.b16 %v2733
    %v2889 = vunpack.c.l.b16 %v2734
    %v2890 = vunpack.c.h.b16 %v2734
    %v2891 = vunpack.c.l.b16 %v2735
    %v2892 = vunpack.c.h.b16 %v2735
    %v2893 = vunpack.c.l.b16 %v2736
    %v2894 = vunpack.c.h.b16 %v2736
    %v2895 = vunpack.c.l.b16 %v2737
    %v2896 = vunpack.c.h.b16 %v2737
    %v2897 = vunpack.c.l.b16 %v2738
    %v2898 = vunpack.c.h.b16 %v2738
    %v2899 = vunpack.c.l.b16 %v2739
    %v2900 = vunpack.c.h.b16 %v2739
    %v2901 = vunpack.c.l.b16 %v2740
    %v2902 = vunpack.c.h.b16 %v2740
    %v2903 = vunpack.c.l.b16 %v2741
    %v2904 = vunpack.c.h.b16 %v2741
    %v2905 = vunpack.c.l.b16 %v2742
    %v2906 = vunpack.c.h.b16 %v2742
    %v2907 = vunpack.c.l.b16 %v2743
    %v2908 = vunpack.c.h.b16 %v2743
    %v2909 = vunpack.c.l.b16 %v2744
    %v2910 = vunpack.c.h.b16 %v2744
    %v2911 = vunpack.c.l.b16 %v2745
    %v2912 = vunpack.c.h.b16 %v2745
    %v2913 = vunpack.c.l.b16 %v2746
    %v2914 = vunpack.c.h.b16 %v2746
    %v2915 = vunpack.c.l.b16 %v2747
    %v2916 = vunpack.c.h.b16 %v2747
    %v2917 = vunpack.c.l.b16 %v2748
    %v2918 = vunpack.c.h.b16 %v2748
    %v2919 = vunpack.c.l.b16 %v2749
    %v2920 = vunpack.c.h.b16 %v2749
    %v2921 = vunpack.c.l.b16 %v2750
    %v2922 = vunpack.c.h.b16 %v2750
    %v2923 = vunpack.c.l.b16 %v2751
    %v2924 = vunpack.c.h.b16 %v2751
    %v2925 = vunpack.c.l.b16 %v2752
    %v2926 = vunpack.c.h.b16 %v2752
    %v2927 = vunpack.c.l.b16 %v2753
    %v2928 = vunpack.c.h.b16 %v2753
    %v2929 = vunpack.c.l.b16 %v2754
    %v2930 = vunpack.c.h.b16 %v2754
    %v2931 = vunpack.c.l.b16 %v2755
    %v2932 = vunpack.c.h.b16 %v2755
    %v2933 = vunpack.c.l.b16 %v2756
    %v2934 = vunpack.c.h.b16 %v2756
    %v2935 = vunpack.c.l.b16 %v2757
    %v2936 = vunpack.c.h.b16 %v2757
    %v2937 = vunpack.c.l.b16 %v2758
    %v2938 = vunpack.c.h.b16 %v2758
    %v2939 = vunpack.c.l.b16 %v2759
    %v2940 = vunpack.c.h.b16 %v2759
    %v2941 = vunpack.c.l.b16 %v2760
    %v2942 = vunpack.c.h.b16 %v2760
    %v2943 = vunpack.c.l.b16 %v2761
    %v2944 = vunpack.c.h.b16 %v2761
    %v2945 = vunpack.c.l.b16 %v2762
    %v2946 = vunpack.c.h.b16 %v2762
    %v2947 = vunpack.c.l.b16 %v2763
    %v2948 = vunpack.c.h.b16 %v2763
    %v2949 = vunpack.c.l.b16 %v2764
    %v2950 = vunpack.c.h.b16 %v2764
    %v2951 = vunpack.c.l.b16 %v2765
    %v2952 = vunpack.c.h.b16 %v2765
    %v2953 = vunpack.c.l.b16 %v2766
    %v2954 = vunpack.c.h.b16 %v2766
    %v2955 = vunpack.c.l.b16 %v2767
    %v2956 = vunpack.c.h.b16 %v2767
    %v2957 = vunpack.c.l.b16 %v2768
    %v2958 = vunpack.c.h.b16 %v2768
    %v2959 = vunpack.c.l.b16 %v2769
    %v2960 = vunpack.c.h.b16 %v2769
    %v2961 = vunpack.c.l.b16 %v2770
    %v2962 = vunpack.c.h.b16 %v2770
    %v2963 = vunpack.c.l.b16 %v2771
    %v2964 = vunpack.c.h.b16 %v2771
    %v2965 = vunpack.c.l.b16 %v2772
    %v2966 = vunpack.c.h.b16 %v2772
    %v2967 = vunpack.c.l.b16 %v2773
    %v2968 = vunpack.c.h.b16 %v2773
    %v2969 = vunpack.c.l.b16 %v2774
    %v2970 = vunpack.c.h.b16 %v2774
    %v2971 = vunpack.c.l.b16 %v2775
    %v2972 = vunpack.c.h.b16 %v2775
    %v2973 = vunpack.c.l.b16 %v2776
    %v2974 = vunpack.c.h.b16 %v2776
    %v2975 = vpack.c.b16 %v2849, %v2847
    %v2976 = vpack.c.b16 %v2850, %v2848
    %v2977 = vpack.c.b16 %v2853, %v2851
    %v2978 = vpack.c.b16 %v2854, %v2852
    %v2979 = vpack.c.b16 %v2857, %v2855
    %v2980 = vpack.c.b16 %v2858, %v2856
    %v2981 = vpack.c.b16 %v2861, %v2859
    %v2982 = vpack.c.b16 %v2862, %v2860
    %v2983 = vpack.c.b16 %v2865, %v2863
    %v2984 = vpack.c.b16 %v2866, %v2864
    %v2985 = vpack.c.b16 %v2869, %v2867
    %v2986 = vpack.c.b16 %v2870, %v2868
    %v2987 = vpack.c.b16 %v2873, %v2871
    %v2988 = vpack.c.b16 %v2874, %v2872
    %v2989 = vpack.c.b16 %v2877, %v2875
    %v2990 = vpack.c.b16 %v2878, %v2876
    %v2991 = vpack.c.b16 %v2881, %v2879
    %v2992 = vpack.c.b16 %v2882, %v2880
    %v2993 = vpack.c.b16 %v2885, %v2883
    %v2994 = vpack.c.b16 %v2886, %v2884
    %v2995 = vpack.c.b16 %v2889, %v2887
    %v2996 = vpack.c.b16 %v2890, %v2888
    %v2997 = vpack.c.b16 %v2893, %v2891
    %v2998 = vpack.c.b16 %v2894, %v2892
    %v2999 = vpack.c.b16 %v2897, %v2895
    %v3000 = vpack.c.b16 %v2898, %v2896
    %v3001 = vpack.c.b16 %v2901, %v2899
    %v3002 = vpack.c.b16 %v2902, %v2900
    %v3003 = vpack.c.b16 %v2905, %v2903
    %v3004 = vpack.c.b16 %v2906, %v2904
    %v3005 = vpack.c.b16 %v2909, %v2907
    %v3006 = vpack.c.b16 %v2910, %v2908
    %v3007 = vpack.c.b16 %v2913, %v2911
    %v3008 = vpack.c.b16 %v2914, %v2912
    %v3009 = vpack.c.b16 %v2917, %v2915
    %v3010 = vpack.c.b16 %v2918, %v2916
    %v3011 = vpack.c.b16 %v2921, %v2919
    %v3012 = vpack.c.b16 %v2922, %v2920
    %v3013 = vpack.c.b16 %v2925, %v2923
    %v3014 = vpack.c.b16 %v2926, %v2924
    %v3015 = vpack.c.b16 %v2929, %v2927
    %v3016 = vpack.c.b16 %v2930, %v2928
    %v3017 = vpack.c.b16 %v2933, %v2931
    %v3018 = vpack.c.b16 %v2934, %v2932
    %v3019 = vpack.c.b16 %v2937, %v2935
    %v3020 = vpack.c.b16 %v2938, %v2936
    %v3021 = vpack.c.b16 %v2941, %v2939
    %v3022 = vpack.c.b16 %v2942, %v2940
    %v3023 = vpack.c.b16 %v2945, %v2943
    %v3024 = vpack.c.b16 %v2946, %v2944
    %v3025 = vpack.c.b16 %v2949, %v2947
    %v3026 = vpack.c.b16 %v2950, %v2948
    %v3027 = vpack.c.b16 %v2953, %v2951
    %v3028 = vpack.c.b16 %v2954, %v2952
    %v3029 = vpack.c.b16 %v2957, %v2955
    %v3030 = vpack.c.b16 %v2958, %v2956
    %v3031 = vpack.c.b16 %v2961, %v2959
    %v3032 = vpack.c.b16 %v2962, %v2960
    %v3033 = vpack.c.b16 %v2965, %v2963
    %v3034 = vpack.c.b16 %v2966, %v2964
    %v3035 = vpack.c.b16 %v2969, %v2967
    %v3036 = vpack.c.b16 %v2970, %v2968
    %v3037 = vpack.c.b16 %v2973, %v2971
    %v3038 = vpack.c.b16 %v2974, %v2972
    %3103 = vmatpush.bf16.msra.mxu0 %v2989
    %3104 = vmatpush.bf16.msra.mxu0 %v2987
    %3105 = vmatpush.bf16.msra.mxu0 %v2985
    %3106 = vmatpush.bf16.msra.mxu0 %v2983
    %3107 = vmatpush.bf16.msra.mxu0 %v2981
    %3108 = vmatpush.bf16.msra.mxu0 %v2979
    %3109 = vmatpush.bf16.msra.mxu0 %v2977
    %3110 = vmatpush.bf16.msra.mxu0 %v2975
    %3111 = vmatmul.bf16.gmra.mxu0 %v2709
    %v3112 = vpop.f32.mrf.mxu0
    %v3113 = vadd.f32 %v2779, %v3112
    %v3114 = vpop.f32.mrf.mxu0
    %3115 = vdwg.mxu0
    %3116 = vmatpush.bf16.msra.mxu0 %v3005
    %3117 = vmatpush.bf16.msra.mxu0 %v3003
    %3118 = vmatpush.bf16.msra.mxu0 %v3001
    %3119 = vmatpush.bf16.msra.mxu0 %v2999
    %3120 = vmatpush.bf16.msra.mxu0 %v2997
    %3121 = vmatpush.bf16.msra.mxu0 %v2995
    %3122 = vmatpush.bf16.msra.mxu0 %v2993
    %3123 = vmatpush.bf16.msra.mxu0 %v2991
    %3124 = vmatmul.bf16.gmra.mxu0 %v2710
    %v3125 = vpop.f32.mrf.mxu0
    %v3126 = vadd.f32 %v3113, %v3125
    %v3127 = vpop.f32.mrf.mxu0
    %3128 = vdwg.mxu0
    %3129 = vmatpush.bf16.msra.mxu0 %v3021
    %3130 = vmatpush.bf16.msra.mxu0 %v3019
    %3131 = vmatpush.bf16.msra.mxu0 %v3017
    %3132 = vmatpush.bf16.msra.mxu0 %v3015
    %3133 = vmatpush.bf16.msra.mxu0 %v3013
    %3134 = vmatpush.bf16.msra.mxu0 %v3011
    %3135 = vmatpush.bf16.msra.mxu0 %v3009
    %3136 = vmatpush.bf16.msra.mxu0 %v3007
    %3137 = vmatmul.bf16.gmra.mxu0 %v2711
    %v3138 = vpop.f32.mrf.mxu0
    %v3139 = vadd.f32 %v3126, %v3138
    %v3140 = vpop.f32.mrf.mxu0
    %3141 = vdwg.mxu0
    %3142 = vmatpush.bf16.msra.mxu0 %v3037
    %3143 = vmatpush.bf16.msra.mxu0 %v3035
    %3144 = vmatpush.bf16.msra.mxu0 %v3033
    %3145 = vmatpush.bf16.msra.mxu0 %v3031
    %3146 = vmatpush.bf16.msra.mxu0 %v3029
    %3147 = vmatpush.bf16.msra.mxu0 %v3027
    %3148 = vmatpush.bf16.msra.mxu0 %v3025
    %3149 = vmatpush.bf16.msra.mxu0 %v3023
    %3150 = vmatmul.bf16.gmra.mxu0 %v2712
    %v3151 = vpop.f32.mrf.mxu0
    %v3152 = vadd.f32 %v3139, %v3151
    %v3153 = vpop.f32.mrf.mxu0
    %3154 = vdwg.mxu0
    %3155 = vmatpush.bf16.msra.mxu0 %v2990
    %3156 = vmatpush.bf16.msra.mxu0 %v2988
    %3157 = vmatpush.bf16.msra.mxu0 %v2986
    %3158 = vmatpush.bf16.msra.mxu0 %v2984
    %3159 = vmatpush.bf16.msra.mxu0 %v2982
    %3160 = vmatpush.bf16.msra.mxu0 %v2980
    %3161 = vmatpush.bf16.msra.mxu0 %v2978
    %3162 = vmatpush.bf16.msra.mxu0 %v2976
    %3163 = vmatmul.bf16.gmra.mxu0 %v2709
    %v3164 = vpop.f32.mrf.mxu0
    %v3165 = vadd.f32 %v2780, %v3164
    %v3166 = vpop.f32.mrf.mxu0
    %3167 = vdwg.mxu0
    %3168 = vmatpush.bf16.msra.mxu0 %v3006
    %3169 = vmatpush.bf16.msra.mxu0 %v3004
    %3170 = vmatpush.bf16.msra.mxu0 %v3002
    %3171 = vmatpush.bf16.msra.mxu0 %v3000
    %3172 = vmatpush.bf16.msra.mxu0 %v2998
    %3173 = vmatpush.bf16.msra.mxu0 %v2996
    %3174 = vmatpush.bf16.msra.mxu0 %v2994
    %3175 = vmatpush.bf16.msra.mxu0 %v2992
    %3176 = vmatmul.bf16.gmra.mxu0 %v2710
    %v3177 = vpop.f32.mrf.mxu0
    %v3178 = vadd.f32 %v3165, %v3177
    %v3179 = vpop.f32.mrf.mxu0
    %3180 = vdwg.mxu0
    %3181 = vmatpush.bf16.msra.mxu0 %v3022
    %3182 = vmatpush.bf16.msra.mxu0 %v3020
    %3183 = vmatpush.bf16.msra.mxu0 %v3018
    %3184 = vmatpush.bf16.msra.mxu0 %v3016
    %3185 = vmatpush.bf16.msra.mxu0 %v3014
    %3186 = vmatpush.bf16.msra.mxu0 %v3012
    %3187 = vmatpush.bf16.msra.mxu0 %v3010
    %3188 = vmatpush.bf16.msra.mxu0 %v3008
    %3189 = vmatmul.bf16.gmra.mxu0 %v2711
    %v3190 = vpop.f32.mrf.mxu0
    %v3191 = vadd.f32 %v3178, %v3190
    %v3192 = vpop.f32.mrf.mxu0
    %3193 = vdwg.mxu0
    %3194 = vmatpush.bf16.msra.mxu0 %v3038
    %3195 = vmatpush.bf16.msra.mxu0 %v3036
    %3196 = vmatpush.bf16.msra.mxu0 %v3034
    %3197 = vmatpush.bf16.msra.mxu0 %v3032
    %3198 = vmatpush.bf16.msra.mxu0 %v3030
    %3199 = vmatpush.bf16.msra.mxu0 %v3028
    %3200 = vmatpush.bf16.msra.mxu0 %v3026
    %3201 = vmatpush.bf16.msra.mxu0 %v3024
    %3202 = vmatmul.bf16.gmra.mxu0 %v2712
    %v3203 = vpop.f32.mrf.mxu0
    %v3204 = vadd.f32 %v3191, %v3203
    %v3205 = vpop.f32.mrf.mxu0
    %3206 = vdwg.mxu0
    %v3207 = vmax.f32 %v3152, 0.0
    %v3208 = vmax.f32 %v3204, 0.0
    %v3209 = vpack.c.bf16 %v3207, %v3207
    %v3210 = vpack.c.bf16 %v3208, %v3208
    %v3211 = vld [vmem:[%s9] sm:$0xf]
    %v3212 = vld [vmem:[%s9 + $0x4] sm:$0xf]
    %v3213 = vld [vmem:[%s9 + $0x8] sm:$0xf]
    %v3214 = vld [vmem:[%s9 + $0xc] sm:$0xf]
    %v3215 = vld [vmem:[%s9 + $0x10] sm:$0xf]
    %v3216 = vld [vmem:[%s9 + $0x14] sm:$0xf]
    %v3217 = vld [vmem:[%s9 + $0x18] sm:$0xf]
    %v3218 = vld [vmem:[%s9 + $0x1c] sm:$0xf]
    %v3219 = vld [vmem:[%s9 + $0x20] sm:$0xf]
    %v3220 = vld [vmem:[%s9 + $0x24] sm:$0xf]
    %v3221 = vld [vmem:[%s9 + $0x28] sm:$0xf]
    %v3222 = vld [vmem:[%s9 + $0x2c] sm:$0xf]
    %v3223 = vld [vmem:[%s9 + $0x30] sm:$0xf]
    %v3224 = vld [vmem:[%s9 + $0x34] sm:$0xf]
    %v3225 = vld [vmem:[%s9 + $0x38] sm:$0xf]
    %v3226 = vld [vmem:[%s9 + $0x3c] sm:$0xf]
    %v3227 = vld [vmem:[%s9 + $0x40] sm:$0xf]
    %v3228 = vld [vmem:[%s9 + $0x44] sm:$0xf]
    %v3229 = vld [vmem:[%s9 + $0x48] sm:$0xf]
    %v3230 = vld [vmem:[%s9 + $0x4c] sm:$0xf]
    %v3231 = vld [vmem:[%s9 + $0x50] sm:$0xf]
    %v3232 = vld [vmem:[%s9 + $0x54] sm:$0xf]
    %v3233 = vld [vmem:[%s9 + $0x58] sm:$0xf]
    %v3234 = vld [vmem:[%s9 + $0x5c] sm:$0xf]
    %v3235 = vld [vmem:[%s9 + $0x60] sm:$0xf]
    %v3236 = vld [vmem:[%s9 + $0x64] sm:$0xf]
    %v3237 = vld [vmem:[%s9 + $0x68] sm:$0xf]
    %v3238 = vld [vmem:[%s9 + $0x6c] sm:$0xf]
    %v3239 = vld [vmem:[%s9 + $0x70] sm:$0xf]
    %v3240 = vld [vmem:[%s9 + $0x74] sm:$0xf]
    %v3241 = vld [vmem:[%s9 + $0x78] sm:$0xf]
    %v3242 = vld [vmem:[%s9 + $0x7c] sm:$0xf]
    %v3275 = vunpack.c.l.b16 %v3211
    %v3276 = vunpack.c.l.b16 %v3212
    %v3277 = vunpack.c.l.b16 %v3213
    %v3278 = vunpack.c.l.b16 %v3214
    %v3279 = vunpack.c.l.b16 %v3215
    %v3280 = vunpack.c.l.b16 %v3216
    %v3281 = vunpack.c.l.b16 %v3217
    %v3282 = vunpack.c.l.b16 %v3218
    %v3283 = vunpack.c.l.b16 %v3219
    %v3284 = vunpack.c.l.b16 %v3220
    %v3285 = vunpack.c.l.b16 %v3221
    %v3286 = vunpack.c.l.b16 %v3222
    %v3287 = vunpack.c.l.b16 %v3223
    %v3288 = vunpack.c.l.b16 %v3224
    %v3289 = vunpack.c.l.b16 %v3225
    %v3290 = vunpack.c.l.b16 %v3226
    %v3291 = vunpack.c.l.b16 %v3227
    %v3292 = vunpack.c.l.b16 %v3228
    %v3293 = vunpack.c.l.b16 %v3229
    %v3294 = vunpack.c.l.b16 %v3230
    %v3295 = vunpack.c.l.b16 %v3231
    %v3296 = vunpack.c.l.b16 %v3232
    %v3297 = vunpack.c.l.b16 %v3233
    %v3298 = vunpack.c.l.b16 %v3234
    %v3299 = vunpack.c.l.b16 %v3235
    %v3300 = vunpack.c.l.b16 %v3236
    %v3301 = vunpack.c.l.b16 %v3237
    %v3302 = vunpack.c.l.b16 %v3238
    %v3303 = vunpack.c.l.b16 %v3239
    %v3304 = vunpack.c.l.b16 %v3240
    %v3305 = vunpack.c.l.b16 %v3241
    %v3306 = vunpack.c.l.b16 %v3242
    %v3307 = vpack.c.b16 %v3276, %v3275
    %v3308 = vpack.c.b16 %v3278, %v3277
    %v3309 = vpack.c.b16 %v3280, %v3279
    %v3310 = vpack.c.b16 %v3282, %v3281
    %v3311 = vpack.c.b16 %v3284, %v3283
    %v3312 = vpack.c.b16 %v3286, %v3285
    %v3313 = vpack.c.b16 %v3288, %v3287
    %v3314 = vpack.c.b16 %v3290, %v3289
    %v3315 = vpack.c.b16 %v3292, %v3291
    %v3316 = vpack.c.b16 %v3294, %v3293
    %v3317 = vpack.c.b16 %v3296, %v3295
    %v3318 = vpack.c.b16 %v3298, %v3297
    %v3319 = vpack.c.b16 %v3300, %v3299
    %v3320 = vpack.c.b16 %v3302, %v3301
    %v3321 = vpack.c.b16 %v3304, %v3303
    %v3322 = vpack.c.b16 %v3306, %v3305
    %3339 = vmatpush.bf16.msra.mxu0 %v3314
    %3340 = vmatpush.bf16.msra.mxu0 %v3313
    %3341 = vmatpush.bf16.msra.mxu0 %v3312
    %3342 = vmatpush.bf16.msra.mxu0 %v3311
    %3343 = vmatpush.bf16.msra.mxu0 %v3310
    %3344 = vmatpush.bf16.msra.mxu0 %v3309
    %3345 = vmatpush.bf16.msra.mxu0 %v3308
    %3346 = vmatpush.bf16.msra.mxu0 %v3307
    %3347 = vmatmul.bf16.gmra.mxu0 %v3209
    %v3348 = vpop.f32.mrf.mxu0
    %v3349 = vadd.f32 0.0, %v3348
    %v3350 = vpop.f32.mrf.mxu0
    %3351 = vdwg.mxu0
    %3352 = vmatpush.bf16.msra.mxu0 %v3322
    %3353 = vmatpush.bf16.msra.mxu0 %v3321
    %3354 = vmatpush.bf16.msra.mxu0 %v3320
    %3355 = vmatpush.bf16.msra.mxu0 %v3319
    %3356 = vmatpush.bf16.msra.mxu0 %v3318
    %3357 = vmatpush.bf16.msra.mxu0 %v3317
    %3358 = vmatpush.bf16.msra.mxu0 %v3316
    %3359 = vmatpush.bf16.msra.mxu0 %v3315
    %3360 = vmatmul.bf16.gmra.mxu0 %v3210
    %v3361 = vpop.f32.mrf.mxu0
    %v3362 = vadd.f32 %v3349, %v3361
    %v3363 = vpop.f32.mrf.mxu0
    %3364 = vdwg.mxu0
    %3365 = vst [vmem:[%s10] sm:$0xff] %v3362
    // Predicated region
    $region58: #{histidine_forward.1} parent=1 // pred_check
      _
    $region59: #{histidine_forward.1} parent=1 // pred_check_branch
      %3367 = sbr.rel (0) target = $region61
    $region60: #{histidine_forward.1} parent=1 // pred_region
      _
    $region61: #{histidine_forward.1} parent=1 // pred_fallthru
      _
    // Predicated region
    $region62: #{histidine_forward.1} parent=1 // pred_check
      _
    $region63: #{histidine_forward.1} parent=1 // pred_check_branch
      %3369 = sbr.rel (0) target = $region65
    $region64: #{histidine_forward.1} parent=1 // pred_region
      _
    $region65: #{histidine_forward.1} parent=1 // pred_fallthru
      _
    %3370 = vsyncpa [#allocation3], 1
    %3371 = vsyncpa [#allocation5], 1
    %3372 = vsyncpa [#allocation8], 1

</llo_original>
